<compile_context>
chip_gen: v5e
topology: v5e:2x2
jax: 0.10.0
libtpu: 0.0.40
codegen_flags: <defaults>
</compile_context>

<pallas_src>
import jax
import jax.numpy as jnp
from jax.experimental import pallas as pl
from jax.experimental.pallas import tpu as pltpu

LN_EPS = 1e-5
BN_EPS = 1e-5


def temporal_conv_kernel(x_ref, ln_g_ref, ln_b_ref,
                         wa_ref, ba_ref, wg_ref, bg_ref,
                         wdw_ref, bn_bias_ref,
                         w2_ref, b2_ref, o_ref):
    # One batch element per grid step: activation refs are (T, C); weights are full.
    T, C = x_ref.shape
    K = wdw_ref.shape[0]
    pad = (K - 1) // 2

    x = x_ref[...].astype(jnp.float32)                        # (T, C)

    # ---- LayerNorm over channels (f32 elementwise) ----
    mu = jnp.mean(x, axis=-1, keepdims=True)
    xc = x - mu
    var = jnp.mean(xc * xc, axis=-1, keepdims=True)
    xn = xc * jax.lax.rsqrt(var + LN_EPS)
    xn = xn * ln_g_ref[...] + ln_b_ref[...]

    # ---- Pointwise conv #1 (C -> 2C) + GLU ----
    # w1 pre-split into value/gate halves: two lane-dense bf16 (C, C) matmuls with
    # f32 accumulation; avoids a 2C-wide intermediate and lane-axis slicing.
    xn_bf = xn.astype(jnp.bfloat16)
    a = jnp.dot(xn_bf, wa_ref[...], preferred_element_type=jnp.float32) + ba_ref[...]
    g = jnp.dot(xn_bf, wg_ref[...], preferred_element_type=jnp.float32) + bg_ref[...]
    h = a * jax.nn.sigmoid(g)                                  # (T, C) f32

    # ---- Depthwise conv along time (SAME padding), fused with BatchNorm (eval) ----
    # BN scale is folded into wdw in the wrapper; bias is added after the sum.
    # Each tap is an XLU sublane roll; the wrapped rows are zeroed with a single
    # one-sided comparison against a (T, 1) iota (shift is a trace-time constant).
    wdw = wdw_ref[...]                                         # (K, C), BN-scaled
    t_col = jax.lax.broadcasted_iota(jnp.int32, (T, 1), 0)
    acc = jnp.zeros((T, C), jnp.float32)
    for k in range(K):                                         # static unroll, K small
        shift = pad - k                                        # out[t] uses h[t - shift]
        wk = wdw[k:k + 1, :]                                   # (1, C)
        if shift == 0:
            acc = acc + h * wk
        else:
            rolled = pltpu.roll(h, shift=shift % T, axis=0)
            if shift > 0:
                mask = t_col >= shift                          # lower rows wrapped
            else:
                mask = t_col < (T + shift)                     # upper rows wrapped
            acc = acc + jnp.where(mask, rolled, 0.0) * wk
    y = acc + bn_bias_ref[...]

    # ---- Swish ----
    y = y * jax.nn.sigmoid(y)

    # ---- Pointwise conv #2 (C -> C) ----
    out = jnp.dot(y.astype(jnp.bfloat16), w2_ref[...],
                  preferred_element_type=jnp.float32) + b2_ref[...]

    # TODO(synk): nn.Dropout(p=0.1) is identity in eval mode; train-mode RNG dropout not implemented.
    o_ref[...] = out.astype(o_ref.dtype)


def temporal_conv_module(x, params):
    """x: (B, T, C) float32.  params: dict of deterministic weights (see make_params)."""
    B, T, C = x.shape
    K = params["wdw"].shape[0]

    # Fold BatchNorm1d (eval, running stats) into depthwise weights + one bias (trace time).
    bn_scale = params["bn_g"] * jax.lax.rsqrt(params["bn_v"] + BN_EPS)   # (1, C)
    wdw_f = params["wdw"] * bn_scale                                     # (K, C)
    bn_bias = params["bn_b"] - params["bn_m"] * bn_scale                 # (1, C)

    # Split pointwise-conv-1 into GLU value/gate halves; bf16 operands for the MXU.
    wa = params["w1"][:, :C].astype(jnp.bfloat16)
    wg = params["w1"][:, C:].astype(jnp.bfloat16)
    ba = params["b1"][:, :C]
    bg = params["b1"][:, C:]
    w2 = params["w2"].astype(jnp.bfloat16)
    b2 = params["b2"]

    args = (x, params["ln_g"], params["ln_b"],
            wa, ba, wg, bg, wdw_f, bn_bias, w2, b2)

    def w_spec(arr):
        # Constant index_map -> weight block stays VMEM-resident across grid steps.
        return pl.BlockSpec(arr.shape, lambda b: (0,) * arr.ndim)

    in_specs = ([pl.BlockSpec((None, T, C), lambda b: (b, 0, 0))]      # x: one batch / step
                + [w_spec(a) for a in args[1:]])
    out_spec = pl.BlockSpec((None, T, C), lambda b: (b, 0, 0))

    # Advisory cost for the surrounding XLA schedule.
    flops = B * (6 * T * C * C + 2 * T * C * K)          # 3 (C,C) matmuls + depthwise taps
    transcendentals = 2 * B * T * C                       # GLU sigmoid + Swish sigmoid
    weight_bytes = sum(a.size * a.dtype.itemsize for a in args[1:])
    bytes_accessed = (x.size * x.dtype.itemsize          # streamed input
                      + B * T * C * 4                    # streamed output
                      + weight_bytes)

    # VMEM budget: double-buffered (T, C) in/out tiles + resident weights + headroom
    # for the in-kernel f32 intermediates.  Clamp to v7x's 64 MiB physical VMEM.
    tile_bytes = T * C * 4
    vmem_needed = 2 * 2 * tile_bytes + weight_bytes + 10 * tile_bytes
    vmem_limit = int(min(max(2 * vmem_needed, 16 * 1024 * 1024), 64 * 1024 * 1024))

    return pl.pallas_call(
        temporal_conv_kernel,
        out_shape=jax.ShapeDtypeStruct((B, T, C), jnp.float32),
        grid_spec=pltpu.PrefetchScalarGridSpec(
            num_scalar_prefetch=0,
            grid=(B,),
            in_specs=in_specs,
            out_specs=out_spec),
        compiler_params=pltpu.CompilerParams(
            dimension_semantics=("parallel",),            # shard batch across TCs
            vmem_limit_bytes=vmem_limit),
        cost_estimate=pl.CostEstimate(flops=flops,
                                      transcendentals=transcendentals,
                                      bytes_accessed=bytes_accessed),
    )(*args)


def make_params(key, C, K):
    ks = jax.random.split(key, 12)
    scale = 0.1
    return {
        # LayerNorm affine
        "ln_g": jax.random.normal(ks[0], (1, C), jnp.float32) * scale + 1.0,
        "ln_b": jax.random.normal(ks[1], (1, C), jnp.float32) * scale,
        # Pointwise conv 1: PyTorch weight (2C, C, 1) -> stored transposed (C, 2C)
        "w1": jax.random.normal(ks[2], (C, 2 * C), jnp.float32) * scale,
        "b1": jax.random.normal(ks[3], (1, 2 * C), jnp.float32) * scale,
        # Depthwise conv: PyTorch weight (C, 1, K) -> stored as (K, C), bias=False
        "wdw": jax.random.normal(ks[4], (K, C), jnp.float32) * scale,
        # BatchNorm1d (eval): affine + nontrivial running stats (exercises the folding)
        "bn_g": jax.random.normal(ks[5], (1, C), jnp.float32) * scale + 1.0,
        "bn_b": jax.random.normal(ks[6], (1, C), jnp.float32) * scale,
        "bn_m": jax.random.normal(ks[7], (1, C), jnp.float32) * scale,
        "bn_v": jnp.abs(jax.random.normal(ks[8], (1, C), jnp.float32)) * scale + 1.0,
        # Pointwise conv 2: PyTorch weight (C, C, 1) -> stored transposed (C, C)
        "w2": jax.random.normal(ks[9], (C, C), jnp.float32) * scale,
        "b2": jax.random.normal(ks[10], (1, C), jnp.float32) * scale,
    }


def reference(x, p, K):
    """Pure-JAX f32 reference of the same forward pass (eval mode)."""
    B, T, C = x.shape
    mu = jnp.mean(x, axis=-1, keepdims=True)
    var = jnp.mean((x - mu) ** 2, axis=-1, keepdims=True)
    xn = (x - mu) / jnp.sqrt(var + LN_EPS) * p["ln_g"] + p["ln_b"]
    h = xn @ p["w1"] + p["b1"]
    a, g = h[..., :C], h[..., C:]
    h = a * jax.nn.sigmoid(g)
    pad = (K - 1) // 2
    hp = jnp.pad(h, ((0, 0), (pad, pad), (0, 0)))
    acc = jnp.zeros((B, T, C), jnp.float32)
    for k in range(K):
        acc = acc + hp[:, k:k + T, :] * p["wdw"][k][None, None, :]
    y = (acc - p["bn_m"]) / jnp.sqrt(p["bn_v"] + BN_EPS) * p["bn_g"] + p["bn_b"]
    y = y * jax.nn.sigmoid(y)
    return y @ p["w2"] + p["b2"]


if __name__ == "__main__":
    # Lane-dense layout: C multiple of 128, T multiple of 8; still a small test.
    B, T, C = 2, 64, 128
    K = 7                         # odd kernel_size for 'SAME' padding

    key = jax.random.PRNGKey(0)
    kx, kp = jax.random.split(key)
    x = jax.random.normal(kx, (B, T, C), jnp.float32)
    params = make_params(kp, C, K)

    out = jax.block_until_ready(temporal_conv_module(x, params))
    ref = reference(x, params, K)

    assert out.shape == (B, T, C)
    err = float(jnp.max(jnp.abs(out - ref)))
    # bf16 MXU operands (f32 accumulation) vs a pure-f32 reference -> loose tolerance.
    assert err < 2e-2, f"mismatch vs pure-JAX reference: max abs err = {err}"

    print("KERNEL_OK")
</pallas_src>

<mosaic_0001>
module attributes {stable_mosaic.version = 11 : i64} {
  func.func @temporal_conv_kernel(%arg0: i32, %arg1: memref<1x64x128xf32, #tpu.memory_space<vmem>>, %arg2: memref<1x128xf32, #tpu.memory_space<vmem>>, %arg3: memref<1x128xf32, #tpu.memory_space<vmem>>, %arg4: memref<128x128xbf16, #tpu.memory_space<vmem>>, %arg5: memref<1x128xf32, #tpu.memory_space<vmem>>, %arg6: memref<128x128xbf16, #tpu.memory_space<vmem>>, %arg7: memref<1x128xf32, #tpu.memory_space<vmem>>, %arg8: memref<7x128xf32, #tpu.memory_space<vmem>>, %arg9: memref<1x128xf32, #tpu.memory_space<vmem>>, %arg10: memref<128x128xbf16, #tpu.memory_space<vmem>>, %arg11: memref<1x128xf32, #tpu.memory_space<vmem>>, %arg12: memref<1x64x128xf32, #tpu.memory_space<vmem>>) attributes {dimension_semantics = [#tpu.dimension_semantics<parallel>], iteration_bounds = array<i64: 2>, scalar_prefetch = 0 : i64, scratch_operands = 0 : i64, tpu.core_type = #tpu.core_type<tc>, window_params = [{transform_indices = @transform_0, window_bounds = array<i64: 1, 64, 128>}, {pipeline_mode = #tpu.pipeline_mode<synchronous>, transform_indices = @transform_1, window_bounds = array<i64: 1, 128>}, {pipeline_mode = #tpu.pipeline_mode<synchronous>, transform_indices = @transform_2, window_bounds = array<i64: 1, 128>}, {pipeline_mode = #tpu.pipeline_mode<synchronous>, transform_indices = @transform_3, window_bounds = array<i64: 128, 128>}, {pipeline_mode = #tpu.pipeline_mode<synchronous>, transform_indices = @transform_4, window_bounds = array<i64: 1, 128>}, {pipeline_mode = #tpu.pipeline_mode<synchronous>, transform_indices = @transform_5, window_bounds = array<i64: 128, 128>}, {pipeline_mode = #tpu.pipeline_mode<synchronous>, transform_indices = @transform_6, window_bounds = array<i64: 1, 128>}, {pipeline_mode = #tpu.pipeline_mode<synchronous>, transform_indices = @transform_7, window_bounds = array<i64: 7, 128>}, {pipeline_mode = #tpu.pipeline_mode<synchronous>, transform_indices = @transform_8, window_bounds = array<i64: 1, 128>}, {pipeline_mode = #tpu.pipeline_mode<synchronous>, transform_indices = @transform_9, window_bounds = array<i64: 128, 128>}, {pipeline_mode = #tpu.pipeline_mode<synchronous>, transform_indices = @transform_10, window_bounds = array<i64: 1, 128>}, {transform_indices = @transform_11, window_bounds = array<i64: 1, 64, 128>}]} {
    %c0 = arith.constant 0 : index
    %c0_0 = arith.constant 0 : index
    %c0_1 = arith.constant 0 : index
    %0 = vector.load %arg1[%c0, %c0_0, %c0_1] : memref<1x64x128xf32, #tpu.memory_space<vmem>>, vector<1x64x128xf32>
    %1 = vector.shape_cast %0 : vector<1x64x128xf32> to vector<64x128xf32>
    %cst = arith.constant dense<0.000000e+00> : vector<64xf32>
    %2 = vector.multi_reduction <add>, %1, %cst [1] : vector<64x128xf32> to vector<64xf32>
    %3 = vector.shape_cast %2 : vector<64xf32> to vector<64x1xf32>
    %cst_2 = arith.constant 1.280000e+02 : f32
    %4 = vector.broadcast %cst_2 : f32 to vector<64x1xf32>
    %5 = arith.divf %3, %4 : vector<64x1xf32>
    %6 = vector.broadcast %5 : vector<64x1xf32> to vector<64x128xf32>
    %7 = arith.subf %1, %6 : vector<64x128xf32>
    %8 = arith.mulf %7, %7 : vector<64x128xf32>
    %cst_3 = arith.constant dense<0.000000e+00> : vector<64xf32>
    %9 = vector.multi_reduction <add>, %8, %cst_3 [1] : vector<64x128xf32> to vector<64xf32>
    %10 = vector.shape_cast %9 : vector<64xf32> to vector<64x1xf32>
    %cst_4 = arith.constant 1.280000e+02 : f32
    %11 = vector.broadcast %cst_4 : f32 to vector<64x1xf32>
    %12 = arith.divf %10, %11 : vector<64x1xf32>
    %cst_5 = arith.constant 9.99999974E-6 : f32
    %13 = vector.broadcast %cst_5 : f32 to vector<64x1xf32>
    %14 = arith.addf %12, %13 : vector<64x1xf32>
    %15 = math.rsqrt %14 : vector<64x1xf32>
    %16 = vector.broadcast %15 : vector<64x1xf32> to vector<64x128xf32>
    %17 = arith.mulf %7, %16 : vector<64x128xf32>
    %c0_6 = arith.constant 0 : index
    %c0_7 = arith.constant 0 : index
    %18 = vector.load %arg2[%c0_6, %c0_7] : memref<1x128xf32, #tpu.memory_space<vmem>>, vector<1x128xf32>
    %19 = vector.broadcast %18 : vector<1x128xf32> to vector<64x128xf32>
    %20 = arith.mulf %17, %19 : vector<64x128xf32>
    %c0_8 = arith.constant 0 : index
    %c0_9 = arith.constant 0 : index
    %21 = vector.load %arg3[%c0_8, %c0_9] : memref<1x128xf32, #tpu.memory_space<vmem>>, vector<1x128xf32>
    %22 = vector.broadcast %21 : vector<1x128xf32> to vector<64x128xf32>
    %23 = arith.addf %20, %22 : vector<64x128xf32>
    %24 = arith.truncf %23 : vector<64x128xf32> to vector<64x128xbf16>
    %c0_10 = arith.constant 0 : index
    %c0_11 = arith.constant 0 : index
    %25 = vector.load %arg4[%c0_10, %c0_11] : memref<128x128xbf16, #tpu.memory_space<vmem>>, vector<128x128xbf16>
    %cst_12 = arith.constant dense<0.000000e+00> : vector<64x128xf32>
    %26 = tpu.matmul %24, %25, %cst_12 {dimension_numbers = #tpu.dot_dimension_numbers<[1], [0], [0], [1], [0, 0, 1, 1], [], []>} : vector<64x128xbf16>, vector<128x128xbf16>, vector<64x128xf32> -> vector<64x128xf32>
    %c0_13 = arith.constant 0 : index
    %c0_14 = arith.constant 0 : index
    %27 = vector.load %arg5[%c0_13, %c0_14] : memref<1x128xf32, #tpu.memory_space<vmem>>, vector<1x128xf32>
    %28 = vector.broadcast %27 : vector<1x128xf32> to vector<64x128xf32>
    %29 = arith.addf %26, %28 : vector<64x128xf32>
    %c0_15 = arith.constant 0 : index
    %c0_16 = arith.constant 0 : index
    %30 = vector.load %arg6[%c0_15, %c0_16] : memref<128x128xbf16, #tpu.memory_space<vmem>>, vector<128x128xbf16>
    %cst_17 = arith.constant dense<0.000000e+00> : vector<64x128xf32>
    %31 = tpu.matmul %24, %30, %cst_17 {dimension_numbers = #tpu.dot_dimension_numbers<[1], [0], [0], [1], [0, 0, 1, 1], [], []>} : vector<64x128xbf16>, vector<128x128xbf16>, vector<64x128xf32> -> vector<64x128xf32>
    %c0_18 = arith.constant 0 : index
    %c0_19 = arith.constant 0 : index
    %32 = vector.load %arg7[%c0_18, %c0_19] : memref<1x128xf32, #tpu.memory_space<vmem>>, vector<1x128xf32>
    %33 = vector.broadcast %32 : vector<1x128xf32> to vector<64x128xf32>
    %34 = arith.addf %31, %33 : vector<64x128xf32>
    %35 = arith.negf %34 : vector<64x128xf32>
    %36 = math.exp %35 : vector<64x128xf32>
    %cst_20 = arith.constant 1.000000e+00 : f32
    %37 = vector.broadcast %cst_20 : f32 to vector<64x128xf32>
    %38 = arith.addf %37, %36 : vector<64x128xf32>
    %39 = arith.divf %37, %38 : vector<64x128xf32>
    %40 = arith.mulf %29, %39 : vector<64x128xf32>
    %c0_21 = arith.constant 0 : index
    %c0_22 = arith.constant 0 : index
    %41 = vector.load %arg8[%c0_21, %c0_22] : memref<7x128xf32, #tpu.memory_space<vmem>>, vector<7x128xf32>
    %42 = tpu.iota {dimensions = array<i32: 0>} : vector<64x1xi32>
    %cst_23 = arith.constant 0.000000e+00 : f32
    %43 = vector.broadcast %cst_23 : f32 to vector<64x128xf32>
    %44 = vector.extract_strided_slice %41 {offsets = [0, 0], sizes = [1, 128], strides = [1, 1]} : vector<7x128xf32> to vector<1x128xf32>
    %c3_i32 = arith.constant 3 : i32
    %45 = tpu.dynamic_rotate %40 by %c3_i32 dim 0 : vector<64x128xf32>, i32 -> vector<64x128xf32>
    %c3_i32_24 = arith.constant 3 : i32
    %46 = vector.broadcast %c3_i32_24 : i32 to vector<64x1xi32>
    %47 = arith.cmpi sge, %42, %46 : vector<64x1xi32>
    %cst_25 = arith.constant 0.000000e+00 : f32
    %48 = vector.shape_cast %47 : vector<64x1xi1> to vector<64x1xi1>
    %49 = vector.broadcast %48 : vector<64x1xi1> to vector<64x128xi1>
    %50 = vector.broadcast %cst_25 : f32 to vector<64x128xf32>
    %51 = arith.select %49, %45, %50 : vector<64x128xi1>, vector<64x128xf32>
    %52 = vector.broadcast %44 : vector<1x128xf32> to vector<64x128xf32>
    %53 = arith.mulf %51, %52 : vector<64x128xf32>
    %54 = arith.addf %43, %53 : vector<64x128xf32>
    %55 = vector.extract_strided_slice %41 {offsets = [1, 0], sizes = [1, 128], strides = [1, 1]} : vector<7x128xf32> to vector<1x128xf32>
    %c2_i32 = arith.constant 2 : i32
    %56 = tpu.dynamic_rotate %40 by %c2_i32 dim 0 : vector<64x128xf32>, i32 -> vector<64x128xf32>
    %c2_i32_26 = arith.constant 2 : i32
    %57 = vector.broadcast %c2_i32_26 : i32 to vector<64x1xi32>
    %58 = arith.cmpi sge, %42, %57 : vector<64x1xi32>
    %cst_27 = arith.constant 0.000000e+00 : f32
    %59 = vector.shape_cast %58 : vector<64x1xi1> to vector<64x1xi1>
    %60 = vector.broadcast %59 : vector<64x1xi1> to vector<64x128xi1>
    %61 = vector.broadcast %cst_27 : f32 to vector<64x128xf32>
    %62 = arith.select %60, %56, %61 : vector<64x128xi1>, vector<64x128xf32>
    %63 = vector.broadcast %55 : vector<1x128xf32> to vector<64x128xf32>
    %64 = arith.mulf %62, %63 : vector<64x128xf32>
    %65 = arith.addf %54, %64 : vector<64x128xf32>
    %66 = vector.extract_strided_slice %41 {offsets = [2, 0], sizes = [1, 128], strides = [1, 1]} : vector<7x128xf32> to vector<1x128xf32>
    %c1_i32 = arith.constant 1 : i32
    %67 = tpu.dynamic_rotate %40 by %c1_i32 dim 0 : vector<64x128xf32>, i32 -> vector<64x128xf32>
    %c1_i32_28 = arith.constant 1 : i32
    %68 = vector.broadcast %c1_i32_28 : i32 to vector<64x1xi32>
    %69 = arith.cmpi sge, %42, %68 : vector<64x1xi32>
    %cst_29 = arith.constant 0.000000e+00 : f32
    %70 = vector.shape_cast %69 : vector<64x1xi1> to vector<64x1xi1>
    %71 = vector.broadcast %70 : vector<64x1xi1> to vector<64x128xi1>
    %72 = vector.broadcast %cst_29 : f32 to vector<64x128xf32>
    %73 = arith.select %71, %67, %72 : vector<64x128xi1>, vector<64x128xf32>
    %74 = vector.broadcast %66 : vector<1x128xf32> to vector<64x128xf32>
    %75 = arith.mulf %73, %74 : vector<64x128xf32>
    %76 = arith.addf %65, %75 : vector<64x128xf32>
    %77 = vector.extract_strided_slice %41 {offsets = [3, 0], sizes = [1, 128], strides = [1, 1]} : vector<7x128xf32> to vector<1x128xf32>
    %78 = vector.broadcast %77 : vector<1x128xf32> to vector<64x128xf32>
    %79 = arith.mulf %40, %78 : vector<64x128xf32>
    %80 = arith.addf %76, %79 : vector<64x128xf32>
    %81 = vector.extract_strided_slice %41 {offsets = [4, 0], sizes = [1, 128], strides = [1, 1]} : vector<7x128xf32> to vector<1x128xf32>
    %c63_i32 = arith.constant 63 : i32
    %82 = tpu.dynamic_rotate %40 by %c63_i32 dim 0 : vector<64x128xf32>, i32 -> vector<64x128xf32>
    %c63_i32_30 = arith.constant 63 : i32
    %83 = vector.broadcast %c63_i32_30 : i32 to vector<64x1xi32>
    %84 = arith.cmpi slt, %42, %83 : vector<64x1xi32>
    %cst_31 = arith.constant 0.000000e+00 : f32
    %85 = vector.shape_cast %84 : vector<64x1xi1> to vector<64x1xi1>
    %86 = vector.broadcast %85 : vector<64x1xi1> to vector<64x128xi1>
    %87 = vector.broadcast %cst_31 : f32 to vector<64x128xf32>
    %88 = arith.select %86, %82, %87 : vector<64x128xi1>, vector<64x128xf32>
    %89 = vector.broadcast %81 : vector<1x128xf32> to vector<64x128xf32>
    %90 = arith.mulf %88, %89 : vector<64x128xf32>
    %91 = arith.addf %80, %90 : vector<64x128xf32>
    %92 = vector.extract_strided_slice %41 {offsets = [5, 0], sizes = [1, 128], strides = [1, 1]} : vector<7x128xf32> to vector<1x128xf32>
    %c62_i32 = arith.constant 62 : i32
    %93 = tpu.dynamic_rotate %40 by %c62_i32 dim 0 : vector<64x128xf32>, i32 -> vector<64x128xf32>
    %c62_i32_32 = arith.constant 62 : i32
    %94 = vector.broadcast %c62_i32_32 : i32 to vector<64x1xi32>
    %95 = arith.cmpi slt, %42, %94 : vector<64x1xi32>
    %cst_33 = arith.constant 0.000000e+00 : f32
    %96 = vector.shape_cast %95 : vector<64x1xi1> to vector<64x1xi1>
    %97 = vector.broadcast %96 : vector<64x1xi1> to vector<64x128xi1>
    %98 = vector.broadcast %cst_33 : f32 to vector<64x128xf32>
    %99 = arith.select %97, %93, %98 : vector<64x128xi1>, vector<64x128xf32>
    %100 = vector.broadcast %92 : vector<1x128xf32> to vector<64x128xf32>
    %101 = arith.mulf %99, %100 : vector<64x128xf32>
    %102 = arith.addf %91, %101 : vector<64x128xf32>
    %103 = vector.extract_strided_slice %41 {offsets = [6, 0], sizes = [1, 128], strides = [1, 1]} : vector<7x128xf32> to vector<1x128xf32>
    %c61_i32 = arith.constant 61 : i32
    %104 = tpu.dynamic_rotate %40 by %c61_i32 dim 0 : vector<64x128xf32>, i32 -> vector<64x128xf32>
    %c61_i32_34 = arith.constant 61 : i32
    %105 = vector.broadcast %c61_i32_34 : i32 to vector<64x1xi32>
    %106 = arith.cmpi slt, %42, %105 : vector<64x1xi32>
    %cst_35 = arith.constant 0.000000e+00 : f32
    %107 = vector.shape_cast %106 : vector<64x1xi1> to vector<64x1xi1>
    %108 = vector.broadcast %107 : vector<64x1xi1> to vector<64x128xi1>
    %109 = vector.broadcast %cst_35 : f32 to vector<64x128xf32>
    %110 = arith.select %108, %104, %109 : vector<64x128xi1>, vector<64x128xf32>
    %111 = vector.broadcast %103 : vector<1x128xf32> to vector<64x128xf32>
    %112 = arith.mulf %110, %111 : vector<64x128xf32>
    %113 = arith.addf %102, %112 : vector<64x128xf32>
    %c0_36 = arith.constant 0 : index
    %c0_37 = arith.constant 0 : index
    %114 = vector.load %arg9[%c0_36, %c0_37] : memref<1x128xf32, #tpu.memory_space<vmem>>, vector<1x128xf32>
    %115 = vector.broadcast %114 : vector<1x128xf32> to vector<64x128xf32>
    %116 = arith.addf %113, %115 : vector<64x128xf32>
    %117 = arith.negf %116 : vector<64x128xf32>
    %118 = math.exp %117 : vector<64x128xf32>
    %cst_38 = arith.constant 1.000000e+00 : f32
    %119 = vector.broadcast %cst_38 : f32 to vector<64x128xf32>
    %120 = arith.addf %119, %118 : vector<64x128xf32>
    %121 = arith.divf %119, %120 : vector<64x128xf32>
    %122 = arith.mulf %116, %121 : vector<64x128xf32>
    %123 = arith.truncf %122 : vector<64x128xf32> to vector<64x128xbf16>
    %c0_39 = arith.constant 0 : index
    %c0_40 = arith.constant 0 : index
    %124 = vector.load %arg10[%c0_39, %c0_40] : memref<128x128xbf16, #tpu.memory_space<vmem>>, vector<128x128xbf16>
    %cst_41 = arith.constant dense<0.000000e+00> : vector<64x128xf32>
    %125 = tpu.matmul %123, %124, %cst_41 {dimension_numbers = #tpu.dot_dimension_numbers<[1], [0], [0], [1], [0, 0, 1, 1], [], []>} : vector<64x128xbf16>, vector<128x128xbf16>, vector<64x128xf32> -> vector<64x128xf32>
    %c0_42 = arith.constant 0 : index
    %c0_43 = arith.constant 0 : index
    %126 = vector.load %arg11[%c0_42, %c0_43] : memref<1x128xf32, #tpu.memory_space<vmem>>, vector<1x128xf32>
    %127 = vector.broadcast %126 : vector<1x128xf32> to vector<64x128xf32>
    %128 = arith.addf %125, %127 : vector<64x128xf32>
    %c0_44 = arith.constant 0 : index
    %c0_45 = arith.constant 0 : index
    %c0_46 = arith.constant 0 : index
    %129 = vector.load %arg12[%c0_44, %c0_45, %c0_46] : memref<1x64x128xf32, #tpu.memory_space<vmem>>, vector<1x64x128xf32>
    %130 = vector.shape_cast %129 : vector<1x64x128xf32> to vector<64x128xf32>
    %131 = vector.shape_cast %128 : vector<64x128xf32> to vector<1x64x128xf32>
    tpu.vector_store %arg12[%c0_44, %c0_45, %c0_46], %131 {strides = array<i32>} : memref<1x64x128xf32, #tpu.memory_space<vmem>>, vector<1x64x128xf32>,
    return
  }
  func.func @transform_0(%arg0: i32) -> (i32, i32, i32) {
    %c0_i32 = arith.constant 0 : i32
    %c0_i32_0 = arith.constant 0 : i32
    %c0_i32_1 = arith.constant 0 : i32
    return %arg0, %c0_i32, %c0_i32_0 : i32, i32, i32
  }
  func.func @transform_1(%arg0: i32) -> (i32, i32) {
    %c0_i32 = arith.constant 0 : i32
    %c0_i32_0 = arith.constant 0 : i32
    %c0_i32_1 = arith.constant 0 : i32
    return %c0_i32, %c0_i32_0 : i32, i32
  }
  func.func @transform_2(%arg0: i32) -> (i32, i32) {
    %c0_i32 = arith.constant 0 : i32
    %c0_i32_0 = arith.constant 0 : i32
    %c0_i32_1 = arith.constant 0 : i32
    return %c0_i32, %c0_i32_0 : i32, i32
  }
  func.func @transform_3(%arg0: i32) -> (i32, i32) {
    %c0_i32 = arith.constant 0 : i32
    %c0_i32_0 = arith.constant 0 : i32
    %c0_i32_1 = arith.constant 0 : i32
    return %c0_i32, %c0_i32_0 : i32, i32
  }
  func.func @transform_4(%arg0: i32) -> (i32, i32) {
    %c0_i32 = arith.constant 0 : i32
    %c0_i32_0 = arith.constant 0 : i32
    %c0_i32_1 = arith.constant 0 : i32
    return %c0_i32, %c0_i32_0 : i32, i32
  }
  func.func @transform_5(%arg0: i32) -> (i32, i32) {
    %c0_i32 = arith.constant 0 : i32
    %c0_i32_0 = arith.constant 0 : i32
    %c0_i32_1 = arith.constant 0 : i32
    return %c0_i32, %c0_i32_0 : i32, i32
  }
  func.func @transform_6(%arg0: i32) -> (i32, i32) {
    %c0_i32 = arith.constant 0 : i32
    %c0_i32_0 = arith.constant 0 : i32
    %c0_i32_1 = arith.constant 0 : i32
    return %c0_i32, %c0_i32_0 : i32, i32
  }
  func.func @transform_7(%arg0: i32) -> (i32, i32) {
    %c0_i32 = arith.constant 0 : i32
    %c0_i32_0 = arith.constant 0 : i32
    %c0_i32_1 = arith.constant 0 : i32
    return %c0_i32, %c0_i32_0 : i32, i32
  }
  func.func @transform_8(%arg0: i32) -> (i32, i32) {
    %c0_i32 = arith.constant 0 : i32
    %c0_i32_0 = arith.constant 0 : i32
    %c0_i32_1 = arith.constant 0 : i32
    return %c0_i32, %c0_i32_0 : i32, i32
  }
  func.func @transform_9(%arg0: i32) -> (i32, i32) {
    %c0_i32 = arith.constant 0 : i32
    %c0_i32_0 = arith.constant 0 : i32
    %c0_i32_1 = arith.constant 0 : i32
    return %c0_i32, %c0_i32_0 : i32, i32
  }
  func.func @transform_10(%arg0: i32) -> (i32, i32) {
    %c0_i32 = arith.constant 0 : i32
    %c0_i32_0 = arith.constant 0 : i32
    %c0_i32_1 = arith.constant 0 : i32
    return %c0_i32, %c0_i32_0 : i32, i32
  }
  func.func @transform_11(%arg0: i32) -> (i32, i32, i32) {
    %c0_i32 = arith.constant 0 : i32
    %c0_i32_0 = arith.constant 0 : i32
    %c0_i32_1 = arith.constant 0 : i32
    return %arg0, %c0_i32, %c0_i32_0 : i32, i32, i32
  }
}

</mosaic_0001>

<llo_original>
// kernel: tpu_custom_call.1
$region0: #{tpu_custom_call.1}
  #allocation0 [shape = 'u32[]', space=smem, size = 0x4, offset = 0x4, fixed_abs, tag = 'smem constant byte address 0x4 - core index']
  #allocation1 [shape = 'u32[72,128]{1,0:T(1,128)}', space=vmem, size = 0x9000, scoped, tag = 'internal scratch']
  %s0 = inlined_call_operand.hbm [shape: f32[2,64,128], index: 0, kind: input, shape index: {}]
  %s1 = inlined_call_operand.hbm [shape: f32[1,128], index: 1, kind: input, shape index: {}]
  %s2 = inlined_call_operand.vmem [shape: f32[1,128], index: 2, kind: input, shape index: {}]
  %s3 = inlined_call_operand.hbm [shape: bf16[128,128], index: 3, kind: input, shape index: {}]
  %s4 = inlined_call_operand.vmem [shape: f32[1,128], index: 4, kind: input, shape index: {}]
  %s5 = inlined_call_operand.hbm [shape: bf16[128,128], index: 5, kind: input, shape index: {}]
  %s6 = inlined_call_operand.vmem [shape: f32[1,128], index: 6, kind: input, shape index: {}]
  %s7 = inlined_call_operand.hbm [shape: f32[7,128], index: 7, kind: input, shape index: {}]
  %s8 = inlined_call_operand.vmem [shape: f32[1,128], index: 8, kind: input, shape index: {}]
  %s9 = inlined_call_operand.hbm [shape: bf16[128,128], index: 9, kind: input, shape index: {}]
  %s10 = inlined_call_operand.vmem [shape: f32[1,128], index: 10, kind: input, shape index: {}]
  %s11 = inlined_call_operand.hbm [shape: f32[2,64,128], index: 11, kind: output, shape index: {}]
  %s12 = sld [smem:[#allocation0]]
  $region101: #{tpu_custom_call.1} parent=0
    _
  %s14 = ssub.s32 1, %s12
  %s15 = scalar_select 0, %s14, %s12
  $region1: #{tpu_custom_call.1} parent=0
    #allocation2 [shape = 'u8[65536]{0}', space=vmem, size = 0x10000, scoped, tag = 'input window, operand 0']
    #allocation3 [shape = 's32[2]{0}', space=sflag, size = 0x8, scoped, tag = 'scoped memory for tpu_custom_call.1']
    #allocation4 [shape = 's32[2]{0}', space=sflag, size = 0x8, scoped, tag = 'scoped memory for tpu_custom_call.1']
    #allocation5 [shape = 'u8[512]{0}', space=vmem, size = 0x400, scoped, tag = 'input window, operand 1, single buffered']
    #allocation6 [shape = 's32[1]{0}', space=sflag, size = 0x4, scoped, tag = 'scoped memory for tpu_custom_call.1']
    #allocation7 [shape = 'u8[32768]{0}', space=vmem, size = 0x8000, scoped, tag = 'input window, operand 3, single buffered']
    #allocation8 [shape = 'u8[32768]{0}', space=vmem, size = 0x8000, scoped, tag = 'input window, operand 5, single buffered']
    #allocation9 [shape = 's32[1]{0}', space=sflag, size = 0x4, scoped, tag = 'scoped memory for tpu_custom_call.1']
    #allocation10 [shape = 'u8[4096]{0}', space=vmem, size = 0x1000, scoped, tag = 'input window, operand 7, single buffered']
    #allocation11 [shape = 'u8[32768]{0}', space=vmem, size = 0x8000, scoped, tag = 'input window, operand 9, single buffered']
    #allocation12 [shape = 's32[1]{0}', space=sflag, size = 0x4, scoped, tag = 'scoped memory for tpu_custom_call.1']
    #allocation13 [shape = 'u8[65536]{0}', space=vmem, size = 0x10000, scoped, tag = 'output window, operand 0']
    %16 = vsyncpa [#allocation3], 0
    %s17 = scalar_lea.sflag [#allocation3], 1
    %18 = vsyncpa %s17, 0
    %19 = vsyncpa [#allocation6], 0
    %20 = vsyncpa [#allocation9], 0
    %21 = vsyncpa [#allocation12], 0
    %22 = vsyncpa [#allocation4], 0
    %s23 = scalar_lea.sflag [#allocation4], 1
    %24 = vsyncpa %s23, 0
    loop: start=0, step=1, limit=4
    $region2: #{tpu_custom_call.1} parent=1 // loop_pre_header
      _
    $region3: #{tpu_custom_call.1} parent=1 // loop_header
      %s26 = sphi 0, %s30
      %p27 = scmp.ge.s32.totalorder %s26, 4
      %s36 = sphi 0, %s38
      %s39 = sphi 0, %s36
      %s40 = sphi 0, %s39
      %s56 = sphi 0, %s40
      %s60 = sphi 0, %s60
      %s62 = sphi 0, %s60
      %s63 = sphi 0, %s62
      %s77 = sphi 0, %s63
      %s81 = sphi 0, %s81
      %s83 = sphi 0, %s81
      %s84 = sphi 0, %s83
      %s98 = sphi 0, %s84
      %s102 = sphi 0, %s102
      %s104 = sphi 0, %s102
      %s105 = sphi 0, %s104
      %s119 = sphi 0, %s105
      %s123 = sphi 0, %s123
      %s125 = sphi 0, %s123
      %s126 = sphi 0, %s125
      %s140 = sphi 0, %s126
      %s144 = sphi 0, %s144
      %s146 = sphi 0, %s144
      %s147 = sphi 0, %s146
      %s161 = sphi 0, %s147
      %s165 = sphi 0, %s165
      %s167 = sphi 0, %s165
      %s168 = sphi 0, %s167
      %s182 = sphi 0, %s168
      %s186 = sphi 0, %s186
      %s188 = sphi 0, %s186
      %s189 = sphi 0, %s188
      %s203 = sphi 0, %s189
      %s207 = sphi 0, %s207
      %s209 = sphi 0, %s207
      %s210 = sphi 0, %s209
      %s224 = sphi 0, %s210
      %s228 = sphi 0, %s228
      %s230 = sphi 0, %s228
      %s231 = sphi 0, %s230
      %s245 = sphi 0, %s231
      %s249 = sphi 0, %s249
      %s251 = sphi 0, %s249
      %s252 = sphi 0, %s251
      %s266 = sphi 0, %s252
      %s272 = sphi 0, %s274
      %s275 = sphi 0, %s272
      %s276 = sphi 0, %s275
      %s292 = sphi 0, %s276
    $region4: #{tpu_custom_call.1} parent=1 // loop_header_branch
      %29 = sbr.rel (%p27) target = $region8
    $region5: #{tpu_custom_call.1} parent=1 // loop_body
      %s31 = ssub.s32 %s26, 1
      %s32 = ssub.s32 %s26, 2
      %s33 = sadd.s32 %s26, 1
      %s34 = ssub.s32 %s26, %s33
      %p35 = scmp.eq.s32.totalorder %s34, 0
      %s37 = sadd.s32 %s36, 1
      %s38 = scalar_select %p35, %s36, %s37
      %p41 = pneg %p35
      %p42 = scmp.eq.s32.totalorder %s26, 1
      %p43 = por %p41, %p42
      %p44 = scmp.ne.s32.totalorder %s36, %s39
      %p45 = scmp.eq.s32.totalorder %s26, 0
      %p46 = por %p44, %p45
      %p47 = scmp.ne.s32.totalorder %s36, %s39
      %p48 = scmp.eq.s32.totalorder %s31, 1
      %p49 = por %p47, %p48
      %p50 = scmp.ne.s32.totalorder %s39, %s40
      %p51 = scmp.eq.s32.totalorder %s31, 0
      %p52 = por %p50, %p51
      %p53 = scmp.ne.s32.totalorder %s39, %s40
      %p54 = scmp.eq.s32.totalorder %s32, 1
      %p55 = por %p53, %p54
      %p57 = scmp.ne.s32.totalorder %s40, %s56
      %p58 = scmp.eq.s32.totalorder %s32, 0
      %p59 = por %p57, %p58
      %s61 = sadd.s32 %s60, 1
      %p64 = scmp.eq.s32.totalorder %s26, 1
      %p65 = scmp.ne.s32.totalorder %s60, %s62
      %p66 = scmp.eq.s32.totalorder %s26, 0
      %p67 = por %p65, %p66
      %p68 = scmp.ne.s32.totalorder %s60, %s62
      %p69 = scmp.eq.s32.totalorder %s31, 1
      %p70 = por %p68, %p69
      %p71 = scmp.ne.s32.totalorder %s62, %s63
      %p72 = scmp.eq.s32.totalorder %s31, 0
      %p73 = por %p71, %p72
      %p74 = scmp.ne.s32.totalorder %s62, %s63
      %p75 = scmp.eq.s32.totalorder %s32, 1
      %p76 = por %p74, %p75
      %p78 = scmp.ne.s32.totalorder %s63, %s77
      %p79 = scmp.eq.s32.totalorder %s32, 0
      %p80 = por %p78, %p79
      %s82 = sadd.s32 %s81, 1
      %p85 = scmp.eq.s32.totalorder %s26, 1
      %p86 = scmp.ne.s32.totalorder %s81, %s83
      %p87 = scmp.eq.s32.totalorder %s26, 0
      %p88 = por %p86, %p87
      %p89 = scmp.ne.s32.totalorder %s81, %s83
      %p90 = scmp.eq.s32.totalorder %s31, 1
      %p91 = por %p89, %p90
      %p92 = scmp.ne.s32.totalorder %s83, %s84
      %p93 = scmp.eq.s32.totalorder %s31, 0
      %p94 = por %p92, %p93
      %p95 = scmp.ne.s32.totalorder %s83, %s84
      %p96 = scmp.eq.s32.totalorder %s32, 1
      %p97 = por %p95, %p96
      %p99 = scmp.ne.s32.totalorder %s84, %s98
      %p100 = scmp.eq.s32.totalorder %s32, 0
      %p101 = por %p99, %p100
      %s103 = sadd.s32 %s102, 1
      %p106 = scmp.eq.s32.totalorder %s26, 1
      %p107 = scmp.ne.s32.totalorder %s102, %s104
      %p108 = scmp.eq.s32.totalorder %s26, 0
      %p109 = por %p107, %p108
      %p110 = scmp.ne.s32.totalorder %s102, %s104
      %p111 = scmp.eq.s32.totalorder %s31, 1
      %p112 = por %p110, %p111
      %p113 = scmp.ne.s32.totalorder %s104, %s105
      %p114 = scmp.eq.s32.totalorder %s31, 0
      %p115 = por %p113, %p114
      %p116 = scmp.ne.s32.totalorder %s104, %s105
      %p117 = scmp.eq.s32.totalorder %s32, 1
      %p118 = por %p116, %p117
      %p120 = scmp.ne.s32.totalorder %s105, %s119
      %p121 = scmp.eq.s32.totalorder %s32, 0
      %p122 = por %p120, %p121
      %s124 = sadd.s32 %s123, 1
      %p127 = scmp.eq.s32.totalorder %s26, 1
      %p128 = scmp.ne.s32.totalorder %s123, %s125
      %p129 = scmp.eq.s32.totalorder %s26, 0
      %p130 = por %p128, %p129
      %p131 = scmp.ne.s32.totalorder %s123, %s125
      %p132 = scmp.eq.s32.totalorder %s31, 1
      %p133 = por %p131, %p132
      %p134 = scmp.ne.s32.totalorder %s125, %s126
      %p135 = scmp.eq.s32.totalorder %s31, 0
      %p136 = por %p134, %p135
      %p137 = scmp.ne.s32.totalorder %s125, %s126
      %p138 = scmp.eq.s32.totalorder %s32, 1
      %p139 = por %p137, %p138
      %p141 = scmp.ne.s32.totalorder %s126, %s140
      %p142 = scmp.eq.s32.totalorder %s32, 0
      %p143 = por %p141, %p142
      %s145 = sadd.s32 %s144, 1
      %p148 = scmp.eq.s32.totalorder %s26, 1
      %p149 = scmp.ne.s32.totalorder %s144, %s146
      %p150 = scmp.eq.s32.totalorder %s26, 0
      %p151 = por %p149, %p150
      %p152 = scmp.ne.s32.totalorder %s144, %s146
      %p153 = scmp.eq.s32.totalorder %s31, 1
      %p154 = por %p152, %p153
      %p155 = scmp.ne.s32.totalorder %s146, %s147
      %p156 = scmp.eq.s32.totalorder %s31, 0
      %p157 = por %p155, %p156
      %p158 = scmp.ne.s32.totalorder %s146, %s147
      %p159 = scmp.eq.s32.totalorder %s32, 1
      %p160 = por %p158, %p159
      %p162 = scmp.ne.s32.totalorder %s147, %s161
      %p163 = scmp.eq.s32.totalorder %s32, 0
      %p164 = por %p162, %p163
      %s166 = sadd.s32 %s165, 1
      %p169 = scmp.eq.s32.totalorder %s26, 1
      %p170 = scmp.ne.s32.totalorder %s165, %s167
      %p171 = scmp.eq.s32.totalorder %s26, 0
      %p172 = por %p170, %p171
      %p173 = scmp.ne.s32.totalorder %s165, %s167
      %p174 = scmp.eq.s32.totalorder %s31, 1
      %p175 = por %p173, %p174
      %p176 = scmp.ne.s32.totalorder %s167, %s168
      %p177 = scmp.eq.s32.totalorder %s31, 0
      %p178 = por %p176, %p177
      %p179 = scmp.ne.s32.totalorder %s167, %s168
      %p180 = scmp.eq.s32.totalorder %s32, 1
      %p181 = por %p179, %p180
      %p183 = scmp.ne.s32.totalorder %s168, %s182
      %p184 = scmp.eq.s32.totalorder %s32, 0
      %p185 = por %p183, %p184
      %s187 = sadd.s32 %s186, 1
      %p190 = scmp.eq.s32.totalorder %s26, 1
      %p191 = scmp.ne.s32.totalorder %s186, %s188
      %p192 = scmp.eq.s32.totalorder %s26, 0
      %p193 = por %p191, %p192
      %p194 = scmp.ne.s32.totalorder %s186, %s188
      %p195 = scmp.eq.s32.totalorder %s31, 1
      %p196 = por %p194, %p195
      %p197 = scmp.ne.s32.totalorder %s188, %s189
      %p198 = scmp.eq.s32.totalorder %s31, 0
      %p199 = por %p197, %p198
      %p200 = scmp.ne.s32.totalorder %s188, %s189
      %p201 = scmp.eq.s32.totalorder %s32, 1
      %p202 = por %p200, %p201
      %p204 = scmp.ne.s32.totalorder %s189, %s203
      %p205 = scmp.eq.s32.totalorder %s32, 0
      %p206 = por %p204, %p205
      %s208 = sadd.s32 %s207, 1
      %p211 = scmp.eq.s32.totalorder %s26, 1
      %p212 = scmp.ne.s32.totalorder %s207, %s209
      %p213 = scmp.eq.s32.totalorder %s26, 0
      %p214 = por %p212, %p213
      %p215 = scmp.ne.s32.totalorder %s207, %s209
      %p216 = scmp.eq.s32.totalorder %s31, 1
      %p217 = por %p215, %p216
      %p218 = scmp.ne.s32.totalorder %s209, %s210
      %p219 = scmp.eq.s32.totalorder %s31, 0
      %p220 = por %p218, %p219
      %p221 = scmp.ne.s32.totalorder %s209, %s210
      %p222 = scmp.eq.s32.totalorder %s32, 1
      %p223 = por %p221, %p222
      %p225 = scmp.ne.s32.totalorder %s210, %s224
      %p226 = scmp.eq.s32.totalorder %s32, 0
      %p227 = por %p225, %p226
      %s229 = sadd.s32 %s228, 1
      %p232 = scmp.eq.s32.totalorder %s26, 1
      %p233 = scmp.ne.s32.totalorder %s228, %s230
      %p234 = scmp.eq.s32.totalorder %s26, 0
      %p235 = por %p233, %p234
      %p236 = scmp.ne.s32.totalorder %s228, %s230
      %p237 = scmp.eq.s32.totalorder %s31, 1
      %p238 = por %p236, %p237
      %p239 = scmp.ne.s32.totalorder %s230, %s231
      %p240 = scmp.eq.s32.totalorder %s31, 0
      %p241 = por %p239, %p240
      %p242 = scmp.ne.s32.totalorder %s230, %s231
      %p243 = scmp.eq.s32.totalorder %s32, 1
      %p244 = por %p242, %p243
      %p246 = scmp.ne.s32.totalorder %s231, %s245
      %p247 = scmp.eq.s32.totalorder %s32, 0
      %p248 = por %p246, %p247
      %s250 = sadd.s32 %s249, 1
      %p253 = scmp.eq.s32.totalorder %s26, 1
      %p254 = scmp.ne.s32.totalorder %s249, %s251
      %p255 = scmp.eq.s32.totalorder %s26, 0
      %p256 = por %p254, %p255
      %p257 = scmp.ne.s32.totalorder %s249, %s251
      %p258 = scmp.eq.s32.totalorder %s31, 1
      %p259 = por %p257, %p258
      %p260 = scmp.ne.s32.totalorder %s251, %s252
      %p261 = scmp.eq.s32.totalorder %s31, 0
      %p262 = por %p260, %p261
      %p263 = scmp.ne.s32.totalorder %s251, %s252
      %p264 = scmp.eq.s32.totalorder %s32, 1
      %p265 = por %p263, %p264
      %p267 = scmp.ne.s32.totalorder %s252, %s266
      %p268 = scmp.eq.s32.totalorder %s32, 0
      %p269 = por %p267, %p268
      %s270 = ssub.s32 %s26, %s33
      %p271 = scmp.eq.s32.totalorder %s270, 0
      %s273 = sadd.s32 %s272, 1
      %s274 = scalar_select %p271, %s272, %s273
      %p277 = pneg %p271
      %p278 = scmp.eq.s32.totalorder %s26, 1
      %p279 = por %p277, %p278
      %p280 = scmp.ne.s32.totalorder %s272, %s275
      %p281 = scmp.eq.s32.totalorder %s26, 0
      %p282 = por %p280, %p281
      %p283 = scmp.ne.s32.totalorder %s272, %s275
      %p284 = scmp.eq.s32.totalorder %s31, 1
      %p285 = por %p283, %p284
      %p286 = scmp.ne.s32.totalorder %s275, %s276
      %p287 = scmp.eq.s32.totalorder %s31, 0
      %p288 = por %p286, %p287
      %p289 = scmp.ne.s32.totalorder %s275, %s276
      %p290 = scmp.eq.s32.totalorder %s32, 1
      %p291 = por %p289, %p290
      %p293 = scmp.ne.s32.totalorder %s276, %s292
      %p294 = scmp.eq.s32.totalorder %s32, 0
      %p295 = por %p293, %p294
      %p296 = scmp.le.s32.totalorder 1, %s26
      %p297 = scmp.lt.s32.totalorder %s26, 3
      %p298 = pnand %p296, %p297
      %p299 = pneg %p298
      // Predicated region
      $region9: #{tpu_custom_call.1} parent=5 // pred_check
        _
      $region10: #{tpu_custom_call.1} parent=5 // pred_check_branch
        %301 = sbr.rel (%p298) target = $region12
      $region11: #{tpu_custom_call.1} parent=5 // pred_region
        %s302 = ssub.s32 %s26, 1
        // Predicated region
        $region13: #{tpu_custom_call.1} parent=11 // pred_check
          %p303 = pneg %p73
        $region14: #{tpu_custom_call.1} parent=11 // pred_check_branch
          %305 = sbr.rel (%p303) target = $region16
        $region15: #{tpu_custom_call.1} parent=11 // pred_region
          %307 = vsyncadd [#allocation6], 0
          %s309 = sshll.u32 %s1, 4
          %s310 = int_to_ptr.hbm [resolvable:$true] %s309
          %s311 = sshll.u32 [#allocation5], 4
          %s312 = int_to_ptr.vmem [resolvable:$true] %s311
          %314 = dma.hbm_to_vmem [thread:$0]  %s310, 16, %s312, [#allocation6]
        $region16: #{tpu_custom_call.1} parent=11 // pred_fallthru
          _
        // Predicated region
        $region17: #{tpu_custom_call.1} parent=11 // pred_check
          %p315 = pneg %p94
        $region18: #{tpu_custom_call.1} parent=11 // pred_check_branch
          %317 = sbr.rel (%p315) target = $region20
        $region19: #{tpu_custom_call.1} parent=11 // pred_region
          _
        $region20: #{tpu_custom_call.1} parent=11 // pred_fallthru
          _
        // Predicated region
        $region21: #{tpu_custom_call.1} parent=11 // pred_check
          %p318 = pneg %p115
        $region22: #{tpu_custom_call.1} parent=11 // pred_check_branch
          %320 = sbr.rel (%p318) target = $region24
        $region23: #{tpu_custom_call.1} parent=11 // pred_region
          %322 = vsyncadd [#allocation6], 0
          %s323 = sshll.u32 %s3, 4
          %s324 = int_to_ptr.hbm [resolvable:$true] %s323
          %s325 = sshll.u32 [#allocation7], 4
          %s326 = int_to_ptr.vmem [resolvable:$true] %s325
          %331 = dma.hbm_to_vmem [thread:$0]  %s324, 1024, %s326, [#allocation6], 64, 64, 4
        $region24: #{tpu_custom_call.1} parent=11 // pred_fallthru
          _
        // Predicated region
        $region25: #{tpu_custom_call.1} parent=11 // pred_check
          %p332 = pneg %p136
        $region26: #{tpu_custom_call.1} parent=11 // pred_check_branch
          %334 = sbr.rel (%p332) target = $region28
        $region27: #{tpu_custom_call.1} parent=11 // pred_region
          _
        $region28: #{tpu_custom_call.1} parent=11 // pred_fallthru
          _
        // Predicated region
        $region29: #{tpu_custom_call.1} parent=11 // pred_check
          %p335 = pneg %p157
        $region30: #{tpu_custom_call.1} parent=11 // pred_check_branch
          %337 = sbr.rel (%p335) target = $region32
        $region31: #{tpu_custom_call.1} parent=11 // pred_region
          %339 = vsyncadd [#allocation9], 0
          %s340 = sshll.u32 %s5, 4
          %s341 = int_to_ptr.hbm [resolvable:$true] %s340
          %s342 = sshll.u32 [#allocation8], 4
          %s343 = int_to_ptr.vmem [resolvable:$true] %s342
          %348 = dma.hbm_to_vmem [thread:$0]  %s341, 1024, %s343, [#allocation9], 64, 64, 4
        $region32: #{tpu_custom_call.1} parent=11 // pred_fallthru
          _
        // Predicated region
        $region33: #{tpu_custom_call.1} parent=11 // pred_check
          %p349 = pneg %p178
        $region34: #{tpu_custom_call.1} parent=11 // pred_check_branch
          %351 = sbr.rel (%p349) target = $region36
        $region35: #{tpu_custom_call.1} parent=11 // pred_region
          _
        $region36: #{tpu_custom_call.1} parent=11 // pred_fallthru
          _
        // Predicated region
        $region37: #{tpu_custom_call.1} parent=11 // pred_check
          %p352 = pneg %p199
        $region38: #{tpu_custom_call.1} parent=11 // pred_check_branch
          %354 = sbr.rel (%p352) target = $region40
        $region39: #{tpu_custom_call.1} parent=11 // pred_region
          %356 = vsyncadd [#allocation9], 0
          %s358 = sshll.u32 %s7, 4
          %s359 = int_to_ptr.hbm [resolvable:$true] %s358
          %s360 = sshll.u32 [#allocation10], 4
          %s361 = int_to_ptr.vmem [resolvable:$true] %s360
          %363 = dma.hbm_to_vmem [thread:$0]  %s359, 128, %s361, [#allocation9]
        $region40: #{tpu_custom_call.1} parent=11 // pred_fallthru
          _
        // Predicated region
        $region41: #{tpu_custom_call.1} parent=11 // pred_check
          %p364 = pneg %p220
        $region42: #{tpu_custom_call.1} parent=11 // pred_check_branch
          %366 = sbr.rel (%p364) target = $region44
        $region43: #{tpu_custom_call.1} parent=11 // pred_region
          _
        $region44: #{tpu_custom_call.1} parent=11 // pred_fallthru
          _
        // Predicated region
        $region45: #{tpu_custom_call.1} parent=11 // pred_check
          %p367 = pneg %p241
        $region46: #{tpu_custom_call.1} parent=11 // pred_check_branch
          %369 = sbr.rel (%p367) target = $region48
        $region47: #{tpu_custom_call.1} parent=11 // pred_region
          %371 = vsyncadd [#allocation12], 0
          %s372 = sshll.u32 %s9, 4
          %s373 = int_to_ptr.hbm [resolvable:$true] %s372
          %s374 = sshll.u32 [#allocation11], 4
          %s375 = int_to_ptr.vmem [resolvable:$true] %s374
          %380 = dma.hbm_to_vmem [thread:$0]  %s373, 1024, %s375, [#allocation12], 64, 64, 4
        $region48: #{tpu_custom_call.1} parent=11 // pred_fallthru
          _
        // Predicated region
        $region49: #{tpu_custom_call.1} parent=11 // pred_check
          %p381 = pneg %p262
        $region50: #{tpu_custom_call.1} parent=11 // pred_check_branch
          %383 = sbr.rel (%p381) target = $region52
        $region51: #{tpu_custom_call.1} parent=11 // pred_region
          _
        $region52: #{tpu_custom_call.1} parent=11 // pred_fallthru
          _
      $region12: #{tpu_custom_call.1} parent=5 // pred_fallthru
        _
      %p384 = scmp.lt.s32.totalorder %s26, 2
      // Predicated region
      $region53: #{tpu_custom_call.1} parent=5 // pred_check
        %p385 = pneg %p384
      $region54: #{tpu_custom_call.1} parent=5 // pred_check_branch
        %387 = sbr.rel (%p385) target = $region56
      $region55: #{tpu_custom_call.1} parent=5 // pred_region
        // Predicated region
        $region57: #{tpu_custom_call.1} parent=55 // pred_check
          %p388 = pneg %p46
        $region58: #{tpu_custom_call.1} parent=55 // pred_check_branch
          %390 = sbr.rel (%p388) target = $region60
        $region59: #{tpu_custom_call.1} parent=55 // pred_region
          %s391 = sand.u32 %s36, 1
          %s392 = scalar_lea.sflag [#allocation3], %s391
          %s393 = sand.u32 %s36, 1
          %s394 = smul.addr %s393, 64
          %s395 = scalar_lea.vmem [#allocation2], %s394
          %397 = vsyncadd %s392, 0
          %s398 = smul.addr %s26, 8
          %s399 = smul.addr %s398, 8
          %s400 = scalar_lea.hbm %s0, %s399
          %s401 = sshll.u32 %s400, 4
          %s402 = int_to_ptr.hbm [resolvable:$true] %s401
          %s403 = sshll.u32 %s395, 4
          %s404 = int_to_ptr.vmem [resolvable:$true] %s403
          %409 = dma.hbm_to_vmem [thread:$0]  %s402, 1024, %s404, %s392, 128, 128, 8
        $region60: #{tpu_custom_call.1} parent=55 // pred_fallthru
          _
      $region56: #{tpu_custom_call.1} parent=5 // pred_fallthru
        _
      %p410 = scmp.le.s32.totalorder 1, %s26
      %p411 = scmp.lt.s32.totalorder %s26, 3
      %p412 = pnand %p410, %p411
      %p413 = pneg %p412
      // Predicated region
      $region61: #{tpu_custom_call.1} parent=5 // pred_check
        _
      $region62: #{tpu_custom_call.1} parent=5 // pred_check_branch
        %415 = sbr.rel (%p412) target = $region64
      $region63: #{tpu_custom_call.1} parent=5 // pred_region
        %s416 = ssub.s32 %s26, 1
        %s417 = sand.u32 %s39, 1
        %s418 = scalar_lea.sflag [#allocation3], %s417
        %s419 = sand.u32 %s39, 1
        %s420 = smul.addr %s419, 64
        %s421 = scalar_lea.vmem [#allocation2], %s420
        // Predicated region
        $region65: #{tpu_custom_call.1} parent=63 // pred_check
          %p422 = pneg %p52
        $region66: #{tpu_custom_call.1} parent=63 // pred_check_branch
          %424 = sbr.rel (%p422) target = $region68
        $region67: #{tpu_custom_call.1} parent=63 // pred_region
          %426 = dma.done %s418, 1024
        $region68: #{tpu_custom_call.1} parent=63 // pred_fallthru
          _
        // Predicated region
        $region69: #{tpu_custom_call.1} parent=63 // pred_check
          %p427 = pneg %p73
        $region70: #{tpu_custom_call.1} parent=63 // pred_check_branch
          %429 = sbr.rel (%p427) target = $region72
        $region71: #{tpu_custom_call.1} parent=63 // pred_region
          %431 = dma.done [#allocation6], 16
        $region72: #{tpu_custom_call.1} parent=63 // pred_fallthru
          _
        // Predicated region
        $region73: #{tpu_custom_call.1} parent=63 // pred_check
          %p432 = pneg %p115
        $region74: #{tpu_custom_call.1} parent=63 // pred_check_branch
          %434 = sbr.rel (%p432) target = $region76
        $region75: #{tpu_custom_call.1} parent=63 // pred_region
          %436 = dma.done [#allocation6], 1024
        $region76: #{tpu_custom_call.1} parent=63 // pred_fallthru
          _
        // Predicated region
        $region77: #{tpu_custom_call.1} parent=63 // pred_check
          %p437 = pneg %p157
        $region78: #{tpu_custom_call.1} parent=63 // pred_check_branch
          %439 = sbr.rel (%p437) target = $region80
        $region79: #{tpu_custom_call.1} parent=63 // pred_region
          %441 = dma.done [#allocation9], 1024
        $region80: #{tpu_custom_call.1} parent=63 // pred_fallthru
          _
        // Predicated region
        $region81: #{tpu_custom_call.1} parent=63 // pred_check
          %p442 = pneg %p199
        $region82: #{tpu_custom_call.1} parent=63 // pred_check_branch
          %444 = sbr.rel (%p442) target = $region84
        $region83: #{tpu_custom_call.1} parent=63 // pred_region
          %446 = dma.done [#allocation9], 128
        $region84: #{tpu_custom_call.1} parent=63 // pred_fallthru
          _
        // Predicated region
        $region85: #{tpu_custom_call.1} parent=63 // pred_check
          %p447 = pneg %p241
        $region86: #{tpu_custom_call.1} parent=63 // pred_check_branch
          %449 = sbr.rel (%p447) target = $region88
        $region87: #{tpu_custom_call.1} parent=63 // pred_region
          %451 = dma.done [#allocation12], 1024
        $region88: #{tpu_custom_call.1} parent=63 // pred_fallthru
          _
        %s452 = sand.u32 %s39, 1
        %s453 = scalar_lea.sflag [#allocation3], %s452
        %s454 = sand.u32 %s39, 1
        %s455 = smul.addr %s454, 64
        %s456 = scalar_lea.vmem [#allocation2], %s455
        %p457 = pneg %p52
        %p458 = pneg %p49
        %p459 = pneg %p73
        %p460 = pneg %p70
        %p461 = pneg %p94
        %p462 = pneg %p91
        %p463 = pneg %p115
        %p464 = pneg %p112
        %p465 = pneg %p136
        %p466 = pneg %p133
        %p467 = pneg %p157
        %p468 = pneg %p154
        %p469 = pneg %p178
        %p470 = pneg %p175
        %p471 = pneg %p199
        %p472 = pneg %p196
        %p473 = pneg %p220
        %p474 = pneg %p217
        %p475 = pneg %p241
        %p476 = pneg %p238
        %p477 = pneg %p262
        %p478 = pneg %p259
        %p479 = pneg %p288
        %p480 = pneg %p285
        %s481 = sand.u32 %s275, 1
        %s482 = scalar_lea.sflag [#allocation4], %s481
        %s483 = sand.u32 %s275, 1
        %s484 = smul.addr %s483, 64
        %s485 = scalar_lea.vmem [#allocation13], %s484
        %v486 = vld [vmem:[%s421] sm:$0xff]
        %v487 = vld [vmem:[%s421 + $0x8] sm:$0xff]
        %v488 = vld [vmem:[%s421 + $0x10] sm:$0xff]
        %v489 = vld [vmem:[%s421 + $0x18] sm:$0xff]
        %v490 = vld [vmem:[%s421 + $0x20] sm:$0xff]
        %v491 = vld [vmem:[%s421 + $0x28] sm:$0xff]
        %v492 = vld [vmem:[%s421 + $0x30] sm:$0xff]
        %v493 = vld [vmem:[%s421 + $0x38] sm:$0xff]
        %494 = vadd.xlane.f32.xlu0 %v486
        %v495 = vpop.xlane.xlu0 %494
        %496 = vadd.xlane.f32.xlu0 %v487
        %v497 = vpop.xlane.xlu0 %496
        %498 = vadd.xlane.f32.xlu0 %v488
        %v499 = vpop.xlane.xlu0 %498
        %500 = vadd.xlane.f32.xlu0 %v489
        %v501 = vpop.xlane.xlu0 %500
        %502 = vadd.xlane.f32.xlu0 %v490
        %v503 = vpop.xlane.xlu0 %502
        %504 = vadd.xlane.f32.xlu0 %v491
        %v505 = vpop.xlane.xlu0 %504
        %506 = vadd.xlane.f32.xlu0 %v492
        %v507 = vpop.xlane.xlu0 %506
        %508 = vadd.xlane.f32.xlu0 %v493
        %v509 = vpop.xlane.xlu0 %508
        %v510 = vrcp.pop 128.0
        %v511 = vmul.f32 128.0, %v510
        %v512 = vsub.f32 1.0, %v511
        %v513 = vmul.f32 %v510, %v512
        %v514 = vadd.f32 %v510, %v513
        %vm515 = vweird.f32 %v510
        %v516 = vsel %vm515, %v510, %v514
        %v517 = vmul.f32 %v495, %v516
        %v518 = vmul.f32 %v497, %v516
        %v519 = vmul.f32 %v499, %v516
        %v520 = vmul.f32 %v501, %v516
        %v521 = vmul.f32 %v503, %v516
        %v522 = vmul.f32 %v505, %v516
        %v523 = vmul.f32 %v507, %v516
        %v524 = vmul.f32 %v509, %v516
        %v525 = vsub.f32 %v486, %v517
        %v526 = vsub.f32 %v487, %v518
        %v527 = vsub.f32 %v488, %v519
        %v528 = vsub.f32 %v489, %v520
        %v529 = vsub.f32 %v490, %v521
        %v530 = vsub.f32 %v491, %v522
        %v531 = vsub.f32 %v492, %v523
        %v532 = vsub.f32 %v493, %v524
        %v533 = vmul.f32 %v525, %v525
        %v534 = vmul.f32 %v526, %v526
        %v535 = vmul.f32 %v527, %v527
        %v536 = vmul.f32 %v528, %v528
        %v537 = vmul.f32 %v529, %v529
        %v538 = vmul.f32 %v530, %v530
        %v539 = vmul.f32 %v531, %v531
        %v540 = vmul.f32 %v532, %v532
        %541 = vadd.xlane.f32.xlu0 %v533
        %v542 = vpop.xlane.xlu0 %541
        %543 = vadd.xlane.f32.xlu0 %v534
        %v544 = vpop.xlane.xlu0 %543
        %545 = vadd.xlane.f32.xlu0 %v535
        %v546 = vpop.xlane.xlu0 %545
        %547 = vadd.xlane.f32.xlu0 %v536
        %v548 = vpop.xlane.xlu0 %547
        %549 = vadd.xlane.f32.xlu0 %v537
        %v550 = vpop.xlane.xlu0 %549
        %551 = vadd.xlane.f32.xlu0 %v538
        %v552 = vpop.xlane.xlu0 %551
        %553 = vadd.xlane.f32.xlu0 %v539
        %v554 = vpop.xlane.xlu0 %553
        %555 = vadd.xlane.f32.xlu0 %v540
        %v556 = vpop.xlane.xlu0 %555
        %v557 = vmul.f32 %v542, %v516
        %v558 = vmul.f32 %v544, %v516
        %v559 = vmul.f32 %v546, %v516
        %v560 = vmul.f32 %v548, %v516
        %v561 = vmul.f32 %v550, %v516
        %v562 = vmul.f32 %v552, %v516
        %v563 = vmul.f32 %v554, %v516
        %v564 = vmul.f32 %v556, %v516
        %v565 = vadd.f32 %v557, 1e-05
        %v566 = vadd.f32 %v558, 1e-05
        %v567 = vadd.f32 %v559, 1e-05
        %v568 = vadd.f32 %v560, 1e-05
        %v569 = vadd.f32 %v561, 1e-05
        %v570 = vadd.f32 %v562, 1e-05
        %v571 = vadd.f32 %v563, 1e-05
        %v572 = vadd.f32 %v564, 1e-05
        %v573 = vrsqrt.pop %v565
        %v574 = vmul.f32 %v573, %v565
        %v575 = vmul.f32 %v574, %v573
        %v576 = vmul.f32 0.5, %v575
        %v577 = vsub.f32 1.5, %v576
        %v578 = vmul.f32 %v573, %v577
        %vm579 = vweird.f32 %v565
        %vm580 = vweird.f32 %v573
        %vm581 = vmor %vm579, %vm580
        %v582 = vsel %vm581, %v573, %v578
        %v583 = vrsqrt.pop %v566
        %v584 = vmul.f32 %v583, %v566
        %v585 = vmul.f32 %v584, %v583
        %v586 = vmul.f32 0.5, %v585
        %v587 = vsub.f32 1.5, %v586
        %v588 = vmul.f32 %v583, %v587
        %vm589 = vweird.f32 %v566
        %vm590 = vweird.f32 %v583
        %vm591 = vmor %vm589, %vm590
        %v592 = vsel %vm591, %v583, %v588
        %v593 = vrsqrt.pop %v567
        %v594 = vmul.f32 %v593, %v567
        %v595 = vmul.f32 %v594, %v593
        %v596 = vmul.f32 0.5, %v595
        %v597 = vsub.f32 1.5, %v596
        %v598 = vmul.f32 %v593, %v597
        %vm599 = vweird.f32 %v567
        %vm600 = vweird.f32 %v593
        %vm601 = vmor %vm599, %vm600
        %v602 = vsel %vm601, %v593, %v598
        %v603 = vrsqrt.pop %v568
        %v604 = vmul.f32 %v603, %v568
        %v605 = vmul.f32 %v604, %v603
        %v606 = vmul.f32 0.5, %v605
        %v607 = vsub.f32 1.5, %v606
        %v608 = vmul.f32 %v603, %v607
        %vm609 = vweird.f32 %v568
        %vm610 = vweird.f32 %v603
        %vm611 = vmor %vm609, %vm610
        %v612 = vsel %vm611, %v603, %v608
        %v613 = vrsqrt.pop %v569
        %v614 = vmul.f32 %v613, %v569
        %v615 = vmul.f32 %v614, %v613
        %v616 = vmul.f32 0.5, %v615
        %v617 = vsub.f32 1.5, %v616
        %v618 = vmul.f32 %v613, %v617
        %vm619 = vweird.f32 %v569
        %vm620 = vweird.f32 %v613
        %vm621 = vmor %vm619, %vm620
        %v622 = vsel %vm621, %v613, %v618
        %v623 = vrsqrt.pop %v570
        %v624 = vmul.f32 %v623, %v570
        %v625 = vmul.f32 %v624, %v623
        %v626 = vmul.f32 0.5, %v625
        %v627 = vsub.f32 1.5, %v626
        %v628 = vmul.f32 %v623, %v627
        %vm629 = vweird.f32 %v570
        %vm630 = vweird.f32 %v623
        %vm631 = vmor %vm629, %vm630
        %v632 = vsel %vm631, %v623, %v628
        %v633 = vrsqrt.pop %v571
        %v634 = vmul.f32 %v633, %v571
        %v635 = vmul.f32 %v634, %v633
        %v636 = vmul.f32 0.5, %v635
        %v637 = vsub.f32 1.5, %v636
        %v638 = vmul.f32 %v633, %v637
        %vm639 = vweird.f32 %v571
        %vm640 = vweird.f32 %v633
        %vm641 = vmor %vm639, %vm640
        %v642 = vsel %vm641, %v633, %v638
        %v643 = vrsqrt.pop %v572
        %v644 = vmul.f32 %v643, %v572
        %v645 = vmul.f32 %v644, %v643
        %v646 = vmul.f32 0.5, %v645
        %v647 = vsub.f32 1.5, %v646
        %v648 = vmul.f32 %v643, %v647
        %vm649 = vweird.f32 %v572
        %vm650 = vweird.f32 %v643
        %vm651 = vmor %vm649, %vm650
        %v652 = vsel %vm651, %v643, %v648
        %v653 = vmul.f32 %v525, %v582
        %v654 = vmul.f32 %v526, %v592
        %v655 = vmul.f32 %v527, %v602
        %v656 = vmul.f32 %v528, %v612
        %v657 = vmul.f32 %v529, %v622
        %v658 = vmul.f32 %v530, %v632
        %v659 = vmul.f32 %v531, %v642
        %v660 = vmul.f32 %v532, %v652
        %v661 = vld [vmem:[#allocation5] sm:$0x1]
        %v663 = vperm.slane %v661, 0
        %v665 = vmul.f32 %v653, %v663
        %v666 = vmul.f32 %v654, %v663
        %v667 = vmul.f32 %v655, %v663
        %v668 = vmul.f32 %v656, %v663
        %v669 = vmul.f32 %v657, %v663
        %v670 = vmul.f32 %v658, %v663
        %v671 = vmul.f32 %v659, %v663
        %v672 = vmul.f32 %v660, %v663
        %v673 = vld [vmem:[%s2] sm:$0x1]
        %v675 = vperm.slane %v673, 0
        %v677 = vadd.f32 %v665, %v675
        %v678 = vadd.f32 %v666, %v675
        %v679 = vadd.f32 %v667, %v675
        %v680 = vadd.f32 %v668, %v675
        %v681 = vadd.f32 %v669, %v675
        %v682 = vadd.f32 %v670, %v675
        %v683 = vadd.f32 %v671, %v675
        %v684 = vadd.f32 %v672, %v675
        %v685 = vpack.c.bf16 %v678, %v677
        %v686 = vpack.c.bf16 %v680, %v679
        %v687 = vpack.c.bf16 %v682, %v681
        %v688 = vpack.c.bf16 %v684, %v683
        %v689 = vld [vmem:[#allocation7] sm:$0xf]
        %v690 = vld [vmem:[#allocation7 + $0x4] sm:$0xf]
        %v691 = vld [vmem:[#allocation7 + $0x8] sm:$0xf]
        %v692 = vld [vmem:[#allocation7 + $0xc] sm:$0xf]
        %v693 = vld [vmem:[#allocation7 + $0x10] sm:$0xf]
        %v694 = vld [vmem:[#allocation7 + $0x14] sm:$0xf]
        %v695 = vld [vmem:[#allocation7 + $0x18] sm:$0xf]
        %v696 = vld [vmem:[#allocation7 + $0x1c] sm:$0xf]
        %v697 = vld [vmem:[#allocation7 + $0x20] sm:$0xf]
        %v698 = vld [vmem:[#allocation7 + $0x24] sm:$0xf]
        %v699 = vld [vmem:[#allocation7 + $0x28] sm:$0xf]
        %v700 = vld [vmem:[#allocation7 + $0x2c] sm:$0xf]
        %v701 = vld [vmem:[#allocation7 + $0x30] sm:$0xf]
        %v702 = vld [vmem:[#allocation7 + $0x34] sm:$0xf]
        %v703 = vld [vmem:[#allocation7 + $0x38] sm:$0xf]
        %v704 = vld [vmem:[#allocation7 + $0x3c] sm:$0xf]
        %v705 = vld [vmem:[%s4] sm:$0x1]
        %v707 = vperm.slane %v705, 0
        %v725 = vunpack.c.l.b16 %v689
        %v726 = vunpack.c.l.b16 %v690
        %v727 = vunpack.c.l.b16 %v691
        %v728 = vunpack.c.l.b16 %v692
        %v729 = vunpack.c.l.b16 %v693
        %v730 = vunpack.c.l.b16 %v694
        %v731 = vunpack.c.l.b16 %v695
        %v732 = vunpack.c.l.b16 %v696
        %v733 = vunpack.c.l.b16 %v697
        %v734 = vunpack.c.l.b16 %v698
        %v735 = vunpack.c.l.b16 %v699
        %v736 = vunpack.c.l.b16 %v700
        %v737 = vunpack.c.l.b16 %v701
        %v738 = vunpack.c.l.b16 %v702
        %v739 = vunpack.c.l.b16 %v703
        %v740 = vunpack.c.l.b16 %v704
        %v741 = vpack.c.b16 %v726, %v725
        %v742 = vpack.c.b16 %v728, %v727
        %v743 = vpack.c.b16 %v730, %v729
        %v744 = vpack.c.b16 %v732, %v731
        %v745 = vpack.c.b16 %v734, %v733
        %v746 = vpack.c.b16 %v736, %v735
        %v747 = vpack.c.b16 %v738, %v737
        %v748 = vpack.c.b16 %v740, %v739
        %757 = vmatpush.bf16.msra.mxu0 %v748
        %758 = vmatpush.bf16.msra.mxu0 %v747
        %759 = vmatpush.bf16.msra.mxu0 %v746
        %760 = vmatpush.bf16.msra.mxu0 %v745
        %761 = vmatpush.bf16.msra.mxu0 %v744
        %762 = vmatpush.bf16.msra.mxu0 %v743
        %763 = vmatpush.bf16.msra.mxu0 %v742
        %764 = vmatpush.bf16.msra.mxu0 %v741
        %765 = vmatmul.bf16.gmra.mxu0 %v685
        %v766 = vpop.f32.mrf.mxu0
        %v767 = vadd.f32 %v707, %v766
        %v768 = vpop.f32.mrf.mxu0
        %v769 = vadd.f32 %v707, %v768
        %770 = vmatmul.bf16.gmra.mxu0 %v686
        %v771 = vpop.f32.mrf.mxu0
        %v772 = vadd.f32 %v707, %v771
        %v773 = vpop.f32.mrf.mxu0
        %v774 = vadd.f32 %v707, %v773
        %775 = vmatmul.bf16.gmra.mxu0 %v687
        %v776 = vpop.f32.mrf.mxu0
        %v777 = vadd.f32 %v707, %v776
        %v778 = vpop.f32.mrf.mxu0
        %v779 = vadd.f32 %v707, %v778
        %780 = vmatmul.bf16.gmra.mxu0 %v688
        %v781 = vpop.f32.mrf.mxu0
        %v782 = vadd.f32 %v707, %v781
        %v783 = vpop.f32.mrf.mxu0
        %v784 = vadd.f32 %v707, %v783
        %785 = vdwg.mxu0
        %v786 = vld [vmem:[#allocation8] sm:$0xf]
        %v787 = vld [vmem:[#allocation8 + $0x4] sm:$0xf]
        %v788 = vld [vmem:[#allocation8 + $0x8] sm:$0xf]
        %v789 = vld [vmem:[#allocation8 + $0xc] sm:$0xf]
        %v790 = vld [vmem:[#allocation8 + $0x10] sm:$0xf]
        %v791 = vld [vmem:[#allocation8 + $0x14] sm:$0xf]
        %v792 = vld [vmem:[#allocation8 + $0x18] sm:$0xf]
        %v793 = vld [vmem:[#allocation8 + $0x1c] sm:$0xf]
        %v794 = vld [vmem:[#allocation8 + $0x20] sm:$0xf]
        %v795 = vld [vmem:[#allocation8 + $0x24] sm:$0xf]
        %v796 = vld [vmem:[#allocation8 + $0x28] sm:$0xf]
        %v797 = vld [vmem:[#allocation8 + $0x2c] sm:$0xf]
        %v798 = vld [vmem:[#allocation8 + $0x30] sm:$0xf]
        %v799 = vld [vmem:[#allocation8 + $0x34] sm:$0xf]
        %v800 = vld [vmem:[#allocation8 + $0x38] sm:$0xf]
        %v801 = vld [vmem:[#allocation8 + $0x3c] sm:$0xf]
        %v802 = vld [vmem:[%s6] sm:$0x1]
        %v804 = vperm.slane %v802, 0
        %v822 = vunpack.c.l.b16 %v786
        %v823 = vunpack.c.l.b16 %v787
        %v824 = vunpack.c.l.b16 %v788
        %v825 = vunpack.c.l.b16 %v789
        %v826 = vunpack.c.l.b16 %v790
        %v827 = vunpack.c.l.b16 %v791
        %v828 = vunpack.c.l.b16 %v792
        %v829 = vunpack.c.l.b16 %v793
        %v830 = vunpack.c.l.b16 %v794
        %v831 = vunpack.c.l.b16 %v795
        %v832 = vunpack.c.l.b16 %v796
        %v833 = vunpack.c.l.b16 %v797
        %v834 = vunpack.c.l.b16 %v798
        %v835 = vunpack.c.l.b16 %v799
        %v836 = vunpack.c.l.b16 %v800
        %v837 = vunpack.c.l.b16 %v801
        %v838 = vpack.c.b16 %v823, %v822
        %v839 = vpack.c.b16 %v825, %v824
        %v840 = vpack.c.b16 %v827, %v826
        %v841 = vpack.c.b16 %v829, %v828
        %v842 = vpack.c.b16 %v831, %v830
        %v843 = vpack.c.b16 %v833, %v832
        %v844 = vpack.c.b16 %v835, %v834
        %v845 = vpack.c.b16 %v837, %v836
        %854 = vmatpush.bf16.msra.mxu0 %v845
        %855 = vmatpush.bf16.msra.mxu0 %v844
        %856 = vmatpush.bf16.msra.mxu0 %v843
        %857 = vmatpush.bf16.msra.mxu0 %v842
        %858 = vmatpush.bf16.msra.mxu0 %v841
        %859 = vmatpush.bf16.msra.mxu0 %v840
        %860 = vmatpush.bf16.msra.mxu0 %v839
        %861 = vmatpush.bf16.msra.mxu0 %v838
        %862 = vmatmul.bf16.gmra.mxu0 %v685
        %v863 = vpop.f32.mrf.mxu0
        %v864 = vadd.f32 %v804, %v863
        %v865 = vpop.f32.mrf.mxu0
        %v866 = vadd.f32 %v804, %v865
        %867 = vmatmul.bf16.gmra.mxu0 %v686
        %v868 = vpop.f32.mrf.mxu0
        %v869 = vadd.f32 %v804, %v868
        %v870 = vpop.f32.mrf.mxu0
        %v871 = vadd.f32 %v804, %v870
        %872 = vmatmul.bf16.gmra.mxu0 %v687
        %v873 = vpop.f32.mrf.mxu0
        %v874 = vadd.f32 %v804, %v873
        %v875 = vpop.f32.mrf.mxu0
        %v876 = vadd.f32 %v804, %v875
        %877 = vmatmul.bf16.gmra.mxu0 %v688
        %v878 = vpop.f32.mrf.mxu0
        %v879 = vadd.f32 %v804, %v878
        %v880 = vpop.f32.mrf.mxu0
        %v881 = vadd.f32 %v804, %v880
        %882 = vdwg.mxu0
        %v883 = vxor.u32 %v864, 2147483648
        %v884 = vxor.u32 %v866, 2147483648
        %v885 = vxor.u32 %v869, 2147483648
        %v886 = vxor.u32 %v871, 2147483648
        %v887 = vxor.u32 %v874, 2147483648
        %v888 = vxor.u32 %v876, 2147483648
        %v889 = vxor.u32 %v879, 2147483648
        %v890 = vxor.u32 %v881, 2147483648
        %v891 = vmul.f32 %v883, 1.442695
        %v892 = vpow.pop %v891
        %v893 = vmul.f32 %v884, 1.442695
        %v894 = vpow.pop %v893
        %v895 = vmul.f32 %v885, 1.442695
        %v896 = vpow.pop %v895
        %v897 = vmul.f32 %v886, 1.442695
        %v898 = vpow.pop %v897
        %v899 = vmul.f32 %v887, 1.442695
        %v900 = vpow.pop %v899
        %v901 = vmul.f32 %v888, 1.442695
        %v902 = vpow.pop %v901
        %v903 = vmul.f32 %v889, 1.442695
        %v904 = vpow.pop %v903
        %v905 = vmul.f32 %v890, 1.442695
        %v906 = vpow.pop %v905
        %v907 = vadd.f32 %v892, 1.0
        %v908 = vadd.f32 %v894, 1.0
        %v909 = vadd.f32 %v896, 1.0
        %v910 = vadd.f32 %v898, 1.0
        %v911 = vadd.f32 %v900, 1.0
        %v912 = vadd.f32 %v902, 1.0
        %v913 = vadd.f32 %v904, 1.0
        %v914 = vadd.f32 %v906, 1.0
        %v915 = vrcp.pop %v907
        %v916 = vmul.f32 %v907, %v915
        %v917 = vsub.f32 1.0, %v916
        %v918 = vmul.f32 %v915, %v917
        %v919 = vadd.f32 %v915, %v918
        %vm920 = vweird.f32 %v907
        %vm921 = vweird.f32 %v915
        %vm922 = vmor %vm920, %vm921
        %v923 = vsel %vm922, %v915, %v919
        %v924 = vand.u32 2147483647, %v907
        %vm925 = vcmp.eq.f32.partialorder %v924, 8.507059e+37
        %v926 = vand.u32 %v907, 2147483648
        %v927 = vor.u32 1.1754944e-38, %v926
        %v928 = vsel %vm925, %v927, %v923
        %v929 = vmul.f32 1.0, %v928
        %v930 = vrcp.pop %v908
        %v931 = vmul.f32 %v908, %v930
        %v932 = vsub.f32 1.0, %v931
        %v933 = vmul.f32 %v930, %v932
        %v934 = vadd.f32 %v930, %v933
        %vm935 = vweird.f32 %v908
        %vm936 = vweird.f32 %v930
        %vm937 = vmor %vm935, %vm936
        %v938 = vsel %vm937, %v930, %v934
        %v939 = vand.u32 2147483647, %v908
        %vm940 = vcmp.eq.f32.partialorder %v939, 8.507059e+37
        %v941 = vand.u32 %v908, 2147483648
        %v942 = vor.u32 1.1754944e-38, %v941
        %v943 = vsel %vm940, %v942, %v938
        %v944 = vmul.f32 1.0, %v943
        %v945 = vrcp.pop %v909
        %v946 = vmul.f32 %v909, %v945
        %v947 = vsub.f32 1.0, %v946
        %v948 = vmul.f32 %v945, %v947
        %v949 = vadd.f32 %v945, %v948
        %vm950 = vweird.f32 %v909
        %vm951 = vweird.f32 %v945
        %vm952 = vmor %vm950, %vm951
        %v953 = vsel %vm952, %v945, %v949
        %v954 = vand.u32 2147483647, %v909
        %vm955 = vcmp.eq.f32.partialorder %v954, 8.507059e+37
        %v956 = vand.u32 %v909, 2147483648
        %v957 = vor.u32 1.1754944e-38, %v956
        %v958 = vsel %vm955, %v957, %v953
        %v959 = vmul.f32 1.0, %v958
        %v960 = vrcp.pop %v910
        %v961 = vmul.f32 %v910, %v960
        %v962 = vsub.f32 1.0, %v961
        %v963 = vmul.f32 %v960, %v962
        %v964 = vadd.f32 %v960, %v963
        %vm965 = vweird.f32 %v910
        %vm966 = vweird.f32 %v960
        %vm967 = vmor %vm965, %vm966
        %v968 = vsel %vm967, %v960, %v964
        %v969 = vand.u32 2147483647, %v910
        %vm970 = vcmp.eq.f32.partialorder %v969, 8.507059e+37
        %v971 = vand.u32 %v910, 2147483648
        %v972 = vor.u32 1.1754944e-38, %v971
        %v973 = vsel %vm970, %v972, %v968
        %v974 = vmul.f32 1.0, %v973
        %v975 = vrcp.pop %v911
        %v976 = vmul.f32 %v911, %v975
        %v977 = vsub.f32 1.0, %v976
        %v978 = vmul.f32 %v975, %v977
        %v979 = vadd.f32 %v975, %v978
        %vm980 = vweird.f32 %v911
        %vm981 = vweird.f32 %v975
        %vm982 = vmor %vm980, %vm981
        %v983 = vsel %vm982, %v975, %v979
        %v984 = vand.u32 2147483647, %v911
        %vm985 = vcmp.eq.f32.partialorder %v984, 8.507059e+37
        %v986 = vand.u32 %v911, 2147483648
        %v987 = vor.u32 1.1754944e-38, %v986
        %v988 = vsel %vm985, %v987, %v983
        %v989 = vmul.f32 1.0, %v988
        %v990 = vrcp.pop %v912
        %v991 = vmul.f32 %v912, %v990
        %v992 = vsub.f32 1.0, %v991
        %v993 = vmul.f32 %v990, %v992
        %v994 = vadd.f32 %v990, %v993
        %vm995 = vweird.f32 %v912
        %vm996 = vweird.f32 %v990
        %vm997 = vmor %vm995, %vm996
        %v998 = vsel %vm997, %v990, %v994
        %v999 = vand.u32 2147483647, %v912
        %vm1000 = vcmp.eq.f32.partialorder %v999, 8.507059e+37
        %v1001 = vand.u32 %v912, 2147483648
        %v1002 = vor.u32 1.1754944e-38, %v1001
        %v1003 = vsel %vm1000, %v1002, %v998
        %v1004 = vmul.f32 1.0, %v1003
        %v1005 = vrcp.pop %v913
        %v1006 = vmul.f32 %v913, %v1005
        %v1007 = vsub.f32 1.0, %v1006
        %v1008 = vmul.f32 %v1005, %v1007
        %v1009 = vadd.f32 %v1005, %v1008
        %vm1010 = vweird.f32 %v913
        %vm1011 = vweird.f32 %v1005
        %vm1012 = vmor %vm1010, %vm1011
        %v1013 = vsel %vm1012, %v1005, %v1009
        %v1014 = vand.u32 2147483647, %v913
        %vm1015 = vcmp.eq.f32.partialorder %v1014, 8.507059e+37
        %v1016 = vand.u32 %v913, 2147483648
        %v1017 = vor.u32 1.1754944e-38, %v1016
        %v1018 = vsel %vm1015, %v1017, %v1013
        %v1019 = vmul.f32 1.0, %v1018
        %v1020 = vrcp.pop %v914
        %v1021 = vmul.f32 %v914, %v1020
        %v1022 = vsub.f32 1.0, %v1021
        %v1023 = vmul.f32 %v1020, %v1022
        %v1024 = vadd.f32 %v1020, %v1023
        %vm1025 = vweird.f32 %v914
        %vm1026 = vweird.f32 %v1020
        %vm1027 = vmor %vm1025, %vm1026
        %v1028 = vsel %vm1027, %v1020, %v1024
        %v1029 = vand.u32 2147483647, %v914
        %vm1030 = vcmp.eq.f32.partialorder %v1029, 8.507059e+37
        %v1031 = vand.u32 %v914, 2147483648
        %v1032 = vor.u32 1.1754944e-38, %v1031
        %v1033 = vsel %vm1030, %v1032, %v1028
        %v1034 = vmul.f32 1.0, %v1033
        %v1035 = vmul.f32 %v767, %v929
        %v1036 = vmul.f32 %v769, %v944
        %v1037 = vmul.f32 %v772, %v959
        %v1038 = vmul.f32 %v774, %v974
        %v1039 = vmul.f32 %v777, %v989
        %v1040 = vmul.f32 %v779, %v1004
        %v1041 = vmul.f32 %v782, %v1019
        %v1042 = vmul.f32 %v784, %v1034
        %v1043 = vld [vmem:[#allocation10] sm:$0x7f]
        %v1044 = vlaneseq
        %v1045 = vshrl.u32 %v1044, 7
        %v1046 = vadd.s32 %v1045, 8
        %v1047 = vadd.s32 %v1045, 16
        %v1048 = vadd.s32 %v1045, 24
        %v1049 = vadd.s32 %v1045, 32
        %v1050 = vadd.s32 %v1045, 40
        %v1051 = vadd.s32 %v1045, 48
        %v1052 = vadd.s32 %v1045, 56
        %v1053 = vrot.slane %v1035, 5
        %v1054 = vrot.slane %v1036, 5
        %v1055 = vrot.slane %v1037, 5
        %v1056 = vrot.slane %v1038, 5
        %v1057 = vrot.slane %v1039, 5
        %v1058 = vrot.slane %v1040, 5
        %v1059 = vrot.slane %v1041, 5
        %v1060 = vrot.slane %v1042, 5
        %vm1061 = vcmp.lt.s32.totalorder %v1045, 3
        %v1062 = vsel %vm1061, %v1059, %v1060
        %v1063 = vsel %vm1061, %v1058, %v1059
        %v1064 = vsel %vm1061, %v1057, %v1058
        %v1065 = vsel %vm1061, %v1056, %v1057
        %v1066 = vsel %vm1061, %v1055, %v1056
        %v1067 = vsel %vm1061, %v1054, %v1055
        %v1068 = vsel %vm1061, %v1053, %v1054
        %v1069 = vsel %vm1061, %v1060, %v1053
        %vm1070 = vcmp.ge.s32.totalorder %v1045, 3
        %vm1071 = vcmp.ge.s32.totalorder %v1046, 3
        %vm1072 = vcmp.ge.s32.totalorder %v1047, 3
        %vm1073 = vcmp.ge.s32.totalorder %v1048, 3
        %vm1074 = vcmp.ge.s32.totalorder %v1049, 3
        %vm1075 = vcmp.ge.s32.totalorder %v1050, 3
        %vm1076 = vcmp.ge.s32.totalorder %v1051, 3
        %vm1077 = vcmp.ge.s32.totalorder %v1052, 3
        %v1078 = vsel %vm1070, 1, 0
        %v1079 = vsel %vm1071, 1, 0
        %v1080 = vsel %vm1072, 1, 0
        %v1081 = vsel %vm1073, 1, 0
        %v1082 = vsel %vm1074, 1, 0
        %v1083 = vsel %vm1075, 1, 0
        %v1084 = vsel %vm1076, 1, 0
        %v1085 = vsel %vm1077, 1, 0
        %vm1086 = vcmp.eq.s32.totalorder %v1078, 1
        %vm1087 = vcmp.eq.s32.totalorder %v1079, 1
        %vm1088 = vcmp.eq.s32.totalorder %v1080, 1
        %vm1089 = vcmp.eq.s32.totalorder %v1081, 1
        %vm1090 = vcmp.eq.s32.totalorder %v1082, 1
        %vm1091 = vcmp.eq.s32.totalorder %v1083, 1
        %vm1092 = vcmp.eq.s32.totalorder %v1084, 1
        %vm1093 = vcmp.eq.s32.totalorder %v1085, 1
        %v1094 = vsel %vm1086, %v1069, 0.0
        %v1095 = vsel %vm1087, %v1068, 0.0
        %v1096 = vsel %vm1088, %v1067, 0.0
        %v1097 = vsel %vm1089, %v1066, 0.0
        %v1098 = vsel %vm1090, %v1065, 0.0
        %v1099 = vsel %vm1091, %v1064, 0.0
        %v1100 = vsel %vm1092, %v1063, 0.0
        %v1101 = vsel %vm1093, %v1062, 0.0
        %v1102 = vperm.slane %v1043, 0
        %v1103 = vmul.f32 %v1094, %v1102
        %v1104 = vmul.f32 %v1095, %v1102
        %v1105 = vmul.f32 %v1096, %v1102
        %v1106 = vmul.f32 %v1097, %v1102
        %v1107 = vmul.f32 %v1098, %v1102
        %v1108 = vmul.f32 %v1099, %v1102
        %v1109 = vmul.f32 %v1100, %v1102
        %v1110 = vmul.f32 %v1101, %v1102
        %v1111 = vadd.f32 %v1103, 0.0
        %v1112 = vadd.f32 %v1104, 0.0
        %v1113 = vadd.f32 %v1105, 0.0
        %v1114 = vadd.f32 %v1106, 0.0
        %v1115 = vadd.f32 %v1107, 0.0
        %v1116 = vadd.f32 %v1108, 0.0
        %v1117 = vadd.f32 %v1109, 0.0
        %v1118 = vadd.f32 %v1110, 0.0
        %v1119 = vrot.slane %v1035, 6
        %v1120 = vrot.slane %v1036, 6
        %v1121 = vrot.slane %v1037, 6
        %v1122 = vrot.slane %v1038, 6
        %v1123 = vrot.slane %v1039, 6
        %v1124 = vrot.slane %v1040, 6
        %v1125 = vrot.slane %v1041, 6
        %v1126 = vrot.slane %v1042, 6
        %vm1127 = vcmp.lt.s32.totalorder %v1045, 2
        %v1128 = vsel %vm1127, %v1125, %v1126
        %v1129 = vsel %vm1127, %v1124, %v1125
        %v1130 = vsel %vm1127, %v1123, %v1124
        %v1131 = vsel %vm1127, %v1122, %v1123
        %v1132 = vsel %vm1127, %v1121, %v1122
        %v1133 = vsel %vm1127, %v1120, %v1121
        %v1134 = vsel %vm1127, %v1119, %v1120
        %v1135 = vsel %vm1127, %v1126, %v1119
        %vm1136 = vcmp.ge.s32.totalorder %v1045, 2
        %vm1137 = vcmp.ge.s32.totalorder %v1046, 2
        %vm1138 = vcmp.ge.s32.totalorder %v1047, 2
        %vm1139 = vcmp.ge.s32.totalorder %v1048, 2
        %vm1140 = vcmp.ge.s32.totalorder %v1049, 2
        %vm1141 = vcmp.ge.s32.totalorder %v1050, 2
        %vm1142 = vcmp.ge.s32.totalorder %v1051, 2
        %vm1143 = vcmp.ge.s32.totalorder %v1052, 2
        %v1144 = vsel %vm1136, 1, 0
        %v1145 = vsel %vm1137, 1, 0
        %v1146 = vsel %vm1138, 1, 0
        %v1147 = vsel %vm1139, 1, 0
        %v1148 = vsel %vm1140, 1, 0
        %v1149 = vsel %vm1141, 1, 0
        %v1150 = vsel %vm1142, 1, 0
        %v1151 = vsel %vm1143, 1, 0
        %vm1152 = vcmp.eq.s32.totalorder %v1144, 1
        %vm1153 = vcmp.eq.s32.totalorder %v1145, 1
        %vm1154 = vcmp.eq.s32.totalorder %v1146, 1
        %vm1155 = vcmp.eq.s32.totalorder %v1147, 1
        %vm1156 = vcmp.eq.s32.totalorder %v1148, 1
        %vm1157 = vcmp.eq.s32.totalorder %v1149, 1
        %vm1158 = vcmp.eq.s32.totalorder %v1150, 1
        %vm1159 = vcmp.eq.s32.totalorder %v1151, 1
        %v1160 = vsel %vm1152, %v1135, 0.0
        %v1161 = vsel %vm1153, %v1134, 0.0
        %v1162 = vsel %vm1154, %v1133, 0.0
        %v1163 = vsel %vm1155, %v1132, 0.0
        %v1164 = vsel %vm1156, %v1131, 0.0
        %v1165 = vsel %vm1157, %v1130, 0.0
        %v1166 = vsel %vm1158, %v1129, 0.0
        %v1167 = vsel %vm1159, %v1128, 0.0
        %v1168 = vperm.slane %v1043, 1
        %v1169 = vmul.f32 %v1160, %v1168
        %v1170 = vmul.f32 %v1161, %v1168
        %v1171 = vmul.f32 %v1162, %v1168
        %v1172 = vmul.f32 %v1163, %v1168
        %v1173 = vmul.f32 %v1164, %v1168
        %v1174 = vmul.f32 %v1165, %v1168
        %v1175 = vmul.f32 %v1166, %v1168
        %v1176 = vmul.f32 %v1167, %v1168
        %v1177 = vadd.f32 %v1111, %v1169
        %v1178 = vadd.f32 %v1112, %v1170
        %v1179 = vadd.f32 %v1113, %v1171
        %v1180 = vadd.f32 %v1114, %v1172
        %v1181 = vadd.f32 %v1115, %v1173
        %v1182 = vadd.f32 %v1116, %v1174
        %v1183 = vadd.f32 %v1117, %v1175
        %v1184 = vadd.f32 %v1118, %v1176
        %v1185 = vrot.slane %v1035, 7
        %v1186 = vrot.slane %v1036, 7
        %v1187 = vrot.slane %v1037, 7
        %v1188 = vrot.slane %v1038, 7
        %v1189 = vrot.slane %v1039, 7
        %v1190 = vrot.slane %v1040, 7
        %v1191 = vrot.slane %v1041, 7
        %v1192 = vrot.slane %v1042, 7
        %vm1193 = vcmp.lt.s32.totalorder %v1045, 1
        %v1194 = vsel %vm1193, %v1191, %v1192
        %v1195 = vsel %vm1193, %v1190, %v1191
        %v1196 = vsel %vm1193, %v1189, %v1190
        %v1197 = vsel %vm1193, %v1188, %v1189
        %v1198 = vsel %vm1193, %v1187, %v1188
        %v1199 = vsel %vm1193, %v1186, %v1187
        %v1200 = vsel %vm1193, %v1185, %v1186
        %v1201 = vsel %vm1193, %v1192, %v1185
        %vm1202 = vcmp.ge.s32.totalorder %v1045, 1
        %vm1203 = vcmp.ge.s32.totalorder %v1046, 1
        %vm1204 = vcmp.ge.s32.totalorder %v1047, 1
        %vm1205 = vcmp.ge.s32.totalorder %v1048, 1
        %vm1206 = vcmp.ge.s32.totalorder %v1049, 1
        %vm1207 = vcmp.ge.s32.totalorder %v1050, 1
        %vm1208 = vcmp.ge.s32.totalorder %v1051, 1
        %vm1209 = vcmp.ge.s32.totalorder %v1052, 1
        %v1210 = vsel %vm1202, 1, 0
        %v1211 = vsel %vm1203, 1, 0
        %v1212 = vsel %vm1204, 1, 0
        %v1213 = vsel %vm1205, 1, 0
        %v1214 = vsel %vm1206, 1, 0
        %v1215 = vsel %vm1207, 1, 0
        %v1216 = vsel %vm1208, 1, 0
        %v1217 = vsel %vm1209, 1, 0
        %vm1218 = vcmp.eq.s32.totalorder %v1210, 1
        %vm1219 = vcmp.eq.s32.totalorder %v1211, 1
        %vm1220 = vcmp.eq.s32.totalorder %v1212, 1
        %vm1221 = vcmp.eq.s32.totalorder %v1213, 1
        %vm1222 = vcmp.eq.s32.totalorder %v1214, 1
        %vm1223 = vcmp.eq.s32.totalorder %v1215, 1
        %vm1224 = vcmp.eq.s32.totalorder %v1216, 1
        %vm1225 = vcmp.eq.s32.totalorder %v1217, 1
        %v1226 = vsel %vm1218, %v1201, 0.0
        %v1227 = vsel %vm1219, %v1200, 0.0
        %v1228 = vsel %vm1220, %v1199, 0.0
        %v1229 = vsel %vm1221, %v1198, 0.0
        %v1230 = vsel %vm1222, %v1197, 0.0
        %v1231 = vsel %vm1223, %v1196, 0.0
        %v1232 = vsel %vm1224, %v1195, 0.0
        %v1233 = vsel %vm1225, %v1194, 0.0
        %v1234 = vperm.slane %v1043, 2
        %v1235 = vmul.f32 %v1226, %v1234
        %v1236 = vmul.f32 %v1227, %v1234
        %v1237 = vmul.f32 %v1228, %v1234
        %v1238 = vmul.f32 %v1229, %v1234
        %v1239 = vmul.f32 %v1230, %v1234
        %v1240 = vmul.f32 %v1231, %v1234
        %v1241 = vmul.f32 %v1232, %v1234
        %v1242 = vmul.f32 %v1233, %v1234
        %v1243 = vadd.f32 %v1177, %v1235
        %v1244 = vadd.f32 %v1178, %v1236
        %v1245 = vadd.f32 %v1179, %v1237
        %v1246 = vadd.f32 %v1180, %v1238
        %v1247 = vadd.f32 %v1181, %v1239
        %v1248 = vadd.f32 %v1182, %v1240
        %v1249 = vadd.f32 %v1183, %v1241
        %v1250 = vadd.f32 %v1184, %v1242
        %v1251 = vperm.slane %v1043, 3
        %v1252 = vmul.f32 %v1035, %v1251
        %v1253 = vmul.f32 %v1036, %v1251
        %v1254 = vmul.f32 %v1037, %v1251
        %v1255 = vmul.f32 %v1038, %v1251
        %v1256 = vmul.f32 %v1039, %v1251
        %v1257 = vmul.f32 %v1040, %v1251
        %v1258 = vmul.f32 %v1041, %v1251
        %v1259 = vmul.f32 %v1042, %v1251
        %v1260 = vadd.f32 %v1243, %v1252
        %v1261 = vadd.f32 %v1244, %v1253
        %v1262 = vadd.f32 %v1245, %v1254
        %v1263 = vadd.f32 %v1246, %v1255
        %v1264 = vadd.f32 %v1247, %v1256
        %v1265 = vadd.f32 %v1248, %v1257
        %v1266 = vadd.f32 %v1249, %v1258
        %v1267 = vadd.f32 %v1250, %v1259
        %v1268 = vrot.slane %v1035, 1
        %v1269 = vrot.slane %v1036, 1
        %v1270 = vrot.slane %v1037, 1
        %v1271 = vrot.slane %v1038, 1
        %v1272 = vrot.slane %v1039, 1
        %v1273 = vrot.slane %v1040, 1
        %v1274 = vrot.slane %v1041, 1
        %v1275 = vrot.slane %v1042, 1
        %vm1276 = vcmp.lt.s32.totalorder %v1045, 7
        %v1277 = vsel %vm1276, %v1274, %v1275
        %v1278 = vsel %vm1276, %v1273, %v1274
        %v1279 = vsel %vm1276, %v1272, %v1273
        %v1280 = vsel %vm1276, %v1271, %v1272
        %v1281 = vsel %vm1276, %v1270, %v1271
        %v1282 = vsel %vm1276, %v1269, %v1270
        %v1283 = vsel %vm1276, %v1268, %v1269
        %v1284 = vsel %vm1276, %v1275, %v1268
        %vm1285 = vcmp.lt.s32.totalorder %v1045, 63
        %vm1286 = vcmp.lt.s32.totalorder %v1046, 63
        %vm1287 = vcmp.lt.s32.totalorder %v1047, 63
        %vm1288 = vcmp.lt.s32.totalorder %v1048, 63
        %vm1289 = vcmp.lt.s32.totalorder %v1049, 63
        %vm1290 = vcmp.lt.s32.totalorder %v1050, 63
        %vm1291 = vcmp.lt.s32.totalorder %v1051, 63
        %vm1292 = vcmp.lt.s32.totalorder %v1052, 63
        %v1293 = vsel %vm1285, 1, 0
        %v1294 = vsel %vm1286, 1, 0
        %v1295 = vsel %vm1287, 1, 0
        %v1296 = vsel %vm1288, 1, 0
        %v1297 = vsel %vm1289, 1, 0
        %v1298 = vsel %vm1290, 1, 0
        %v1299 = vsel %vm1291, 1, 0
        %v1300 = vsel %vm1292, 1, 0
        %vm1301 = vcmp.eq.s32.totalorder %v1293, 1
        %vm1302 = vcmp.eq.s32.totalorder %v1294, 1
        %vm1303 = vcmp.eq.s32.totalorder %v1295, 1
        %vm1304 = vcmp.eq.s32.totalorder %v1296, 1
        %vm1305 = vcmp.eq.s32.totalorder %v1297, 1
        %vm1306 = vcmp.eq.s32.totalorder %v1298, 1
        %vm1307 = vcmp.eq.s32.totalorder %v1299, 1
        %vm1308 = vcmp.eq.s32.totalorder %v1300, 1
        %v1309 = vsel %vm1301, %v1283, 0.0
        %v1310 = vsel %vm1302, %v1282, 0.0
        %v1311 = vsel %vm1303, %v1281, 0.0
        %v1312 = vsel %vm1304, %v1280, 0.0
        %v1313 = vsel %vm1305, %v1279, 0.0
        %v1314 = vsel %vm1306, %v1278, 0.0
        %v1315 = vsel %vm1307, %v1277, 0.0
        %v1316 = vsel %vm1308, %v1284, 0.0
        %v1317 = vperm.slane %v1043, 4
        %v1318 = vmul.f32 %v1309, %v1317
        %v1319 = vmul.f32 %v1310, %v1317
        %v1320 = vmul.f32 %v1311, %v1317
        %v1321 = vmul.f32 %v1312, %v1317
        %v1322 = vmul.f32 %v1313, %v1317
        %v1323 = vmul.f32 %v1314, %v1317
        %v1324 = vmul.f32 %v1315, %v1317
        %v1325 = vmul.f32 %v1316, %v1317
        %v1326 = vadd.f32 %v1260, %v1318
        %v1327 = vadd.f32 %v1261, %v1319
        %v1328 = vadd.f32 %v1262, %v1320
        %v1329 = vadd.f32 %v1263, %v1321
        %v1330 = vadd.f32 %v1264, %v1322
        %v1331 = vadd.f32 %v1265, %v1323
        %v1332 = vadd.f32 %v1266, %v1324
        %v1333 = vadd.f32 %v1267, %v1325
        %v1334 = vrot.slane %v1035, 2
        %v1335 = vrot.slane %v1036, 2
        %v1336 = vrot.slane %v1037, 2
        %v1337 = vrot.slane %v1038, 2
        %v1338 = vrot.slane %v1039, 2
        %v1339 = vrot.slane %v1040, 2
        %v1340 = vrot.slane %v1041, 2
        %v1341 = vrot.slane %v1042, 2
        %vm1342 = vcmp.lt.s32.totalorder %v1045, 6
        %v1343 = vsel %vm1342, %v1340, %v1341
        %v1344 = vsel %vm1342, %v1339, %v1340
        %v1345 = vsel %vm1342, %v1338, %v1339
        %v1346 = vsel %vm1342, %v1337, %v1338
        %v1347 = vsel %vm1342, %v1336, %v1337
        %v1348 = vsel %vm1342, %v1335, %v1336
        %v1349 = vsel %vm1342, %v1334, %v1335
        %v1350 = vsel %vm1342, %v1341, %v1334
        %vm1351 = vcmp.lt.s32.totalorder %v1045, 62
        %vm1352 = vcmp.lt.s32.totalorder %v1046, 62
        %vm1353 = vcmp.lt.s32.totalorder %v1047, 62
        %vm1354 = vcmp.lt.s32.totalorder %v1048, 62
        %vm1355 = vcmp.lt.s32.totalorder %v1049, 62
        %vm1356 = vcmp.lt.s32.totalorder %v1050, 62
        %vm1357 = vcmp.lt.s32.totalorder %v1051, 62
        %vm1358 = vcmp.lt.s32.totalorder %v1052, 62
        %v1359 = vsel %vm1351, 1, 0
        %v1360 = vsel %vm1352, 1, 0
        %v1361 = vsel %vm1353, 1, 0
        %v1362 = vsel %vm1354, 1, 0
        %v1363 = vsel %vm1355, 1, 0
        %v1364 = vsel %vm1356, 1, 0
        %v1365 = vsel %vm1357, 1, 0
        %v1366 = vsel %vm1358, 1, 0
        %vm1367 = vcmp.eq.s32.totalorder %v1359, 1
        %vm1368 = vcmp.eq.s32.totalorder %v1360, 1
        %vm1369 = vcmp.eq.s32.totalorder %v1361, 1
        %vm1370 = vcmp.eq.s32.totalorder %v1362, 1
        %vm1371 = vcmp.eq.s32.totalorder %v1363, 1
        %vm1372 = vcmp.eq.s32.totalorder %v1364, 1
        %vm1373 = vcmp.eq.s32.totalorder %v1365, 1
        %vm1374 = vcmp.eq.s32.totalorder %v1366, 1
        %v1375 = vsel %vm1367, %v1349, 0.0
        %v1376 = vsel %vm1368, %v1348, 0.0
        %v1377 = vsel %vm1369, %v1347, 0.0
        %v1378 = vsel %vm1370, %v1346, 0.0
        %v1379 = vsel %vm1371, %v1345, 0.0
        %v1380 = vsel %vm1372, %v1344, 0.0
        %v1381 = vsel %vm1373, %v1343, 0.0
        %v1382 = vsel %vm1374, %v1350, 0.0
        %v1383 = vperm.slane %v1043, 5
        %v1384 = vmul.f32 %v1375, %v1383
        %v1385 = vmul.f32 %v1376, %v1383
        %v1386 = vmul.f32 %v1377, %v1383
        %v1387 = vmul.f32 %v1378, %v1383
        %v1388 = vmul.f32 %v1379, %v1383
        %v1389 = vmul.f32 %v1380, %v1383
        %v1390 = vmul.f32 %v1381, %v1383
        %v1391 = vmul.f32 %v1382, %v1383
        %v1392 = vadd.f32 %v1326, %v1384
        %v1393 = vadd.f32 %v1327, %v1385
        %v1394 = vadd.f32 %v1328, %v1386
        %v1395 = vadd.f32 %v1329, %v1387
        %v1396 = vadd.f32 %v1330, %v1388
        %v1397 = vadd.f32 %v1331, %v1389
        %v1398 = vadd.f32 %v1332, %v1390
        %v1399 = vadd.f32 %v1333, %v1391
        %v1400 = vrot.slane %v1035, 3
        %v1401 = vrot.slane %v1036, 3
        %v1402 = vrot.slane %v1037, 3
        %v1403 = vrot.slane %v1038, 3
        %v1404 = vrot.slane %v1039, 3
        %v1405 = vrot.slane %v1040, 3
        %v1406 = vrot.slane %v1041, 3
        %v1407 = vrot.slane %v1042, 3
        %vm1408 = vcmp.lt.s32.totalorder %v1045, 5
        %v1409 = vsel %vm1408, %v1406, %v1407
        %v1410 = vsel %vm1408, %v1405, %v1406
        %v1411 = vsel %vm1408, %v1404, %v1405
        %v1412 = vsel %vm1408, %v1403, %v1404
        %v1413 = vsel %vm1408, %v1402, %v1403
        %v1414 = vsel %vm1408, %v1401, %v1402
        %v1415 = vsel %vm1408, %v1400, %v1401
        %v1416 = vsel %vm1408, %v1407, %v1400
        %vm1417 = vcmp.lt.s32.totalorder %v1045, 61
        %vm1418 = vcmp.lt.s32.totalorder %v1046, 61
        %vm1419 = vcmp.lt.s32.totalorder %v1047, 61
        %vm1420 = vcmp.lt.s32.totalorder %v1048, 61
        %vm1421 = vcmp.lt.s32.totalorder %v1049, 61
        %vm1422 = vcmp.lt.s32.totalorder %v1050, 61
        %vm1423 = vcmp.lt.s32.totalorder %v1051, 61
        %vm1424 = vcmp.lt.s32.totalorder %v1052, 61
        %v1425 = vsel %vm1417, 1, 0
        %v1426 = vsel %vm1418, 1, 0
        %v1427 = vsel %vm1419, 1, 0
        %v1428 = vsel %vm1420, 1, 0
        %v1429 = vsel %vm1421, 1, 0
        %v1430 = vsel %vm1422, 1, 0
        %v1431 = vsel %vm1423, 1, 0
        %v1432 = vsel %vm1424, 1, 0
        %vm1433 = vcmp.eq.s32.totalorder %v1425, 1
        %vm1434 = vcmp.eq.s32.totalorder %v1426, 1
        %vm1435 = vcmp.eq.s32.totalorder %v1427, 1
        %vm1436 = vcmp.eq.s32.totalorder %v1428, 1
        %vm1437 = vcmp.eq.s32.totalorder %v1429, 1
        %vm1438 = vcmp.eq.s32.totalorder %v1430, 1
        %vm1439 = vcmp.eq.s32.totalorder %v1431, 1
        %vm1440 = vcmp.eq.s32.totalorder %v1432, 1
        %v1441 = vsel %vm1433, %v1415, 0.0
        %v1442 = vsel %vm1434, %v1414, 0.0
        %v1443 = vsel %vm1435, %v1413, 0.0
        %v1444 = vsel %vm1436, %v1412, 0.0
        %v1445 = vsel %vm1437, %v1411, 0.0
        %v1446 = vsel %vm1438, %v1410, 0.0
        %v1447 = vsel %vm1439, %v1409, 0.0
        %v1448 = vsel %vm1440, %v1416, 0.0
        %v1449 = vperm.slane %v1043, 6
        %v1450 = vmul.f32 %v1441, %v1449
        %v1451 = vmul.f32 %v1442, %v1449
        %v1452 = vmul.f32 %v1443, %v1449
        %v1453 = vmul.f32 %v1444, %v1449
        %v1454 = vmul.f32 %v1445, %v1449
        %v1455 = vmul.f32 %v1446, %v1449
        %v1456 = vmul.f32 %v1447, %v1449
        %v1457 = vmul.f32 %v1448, %v1449
        %v1458 = vadd.f32 %v1392, %v1450
        %v1459 = vadd.f32 %v1393, %v1451
        %v1460 = vadd.f32 %v1394, %v1452
        %v1461 = vadd.f32 %v1395, %v1453
        %v1462 = vadd.f32 %v1396, %v1454
        %v1463 = vadd.f32 %v1397, %v1455
        %v1464 = vadd.f32 %v1398, %v1456
        %v1465 = vadd.f32 %v1399, %v1457
        %v1466 = vld [vmem:[%s8] sm:$0x1]
        %v1468 = vperm.slane %v1466, 0
        %v1470 = vadd.f32 %v1458, %v1468
        %v1471 = vadd.f32 %v1459, %v1468
        %v1472 = vadd.f32 %v1460, %v1468
        %v1473 = vadd.f32 %v1461, %v1468
        %v1474 = vadd.f32 %v1462, %v1468
        %v1475 = vadd.f32 %v1463, %v1468
        %v1476 = vadd.f32 %v1464, %v1468
        %v1477 = vadd.f32 %v1465, %v1468
        %v1478 = vxor.u32 %v1470, 2147483648
        %v1479 = vxor.u32 %v1471, 2147483648
        %v1480 = vxor.u32 %v1472, 2147483648
        %v1481 = vxor.u32 %v1473, 2147483648
        %v1482 = vxor.u32 %v1474, 2147483648
        %v1483 = vxor.u32 %v1475, 2147483648
        %v1484 = vxor.u32 %v1476, 2147483648
        %v1485 = vxor.u32 %v1477, 2147483648
        %v1486 = vmul.f32 %v1478, 1.442695
        %v1487 = vpow.pop %v1486
        %v1488 = vmul.f32 %v1479, 1.442695
        %v1489 = vpow.pop %v1488
        %v1490 = vmul.f32 %v1480, 1.442695
        %v1491 = vpow.pop %v1490
        %v1492 = vmul.f32 %v1481, 1.442695
        %v1493 = vpow.pop %v1492
        %v1494 = vmul.f32 %v1482, 1.442695
        %v1495 = vpow.pop %v1494
        %v1496 = vmul.f32 %v1483, 1.442695
        %v1497 = vpow.pop %v1496
        %v1498 = vmul.f32 %v1484, 1.442695
        %v1499 = vpow.pop %v1498
        %v1500 = vmul.f32 %v1485, 1.442695
        %v1501 = vpow.pop %v1500
        %v1502 = vadd.f32 %v1487, 1.0
        %v1503 = vadd.f32 %v1489, 1.0
        %v1504 = vadd.f32 %v1491, 1.0
        %v1505 = vadd.f32 %v1493, 1.0
        %v1506 = vadd.f32 %v1495, 1.0
        %v1507 = vadd.f32 %v1497, 1.0
        %v1508 = vadd.f32 %v1499, 1.0
        %v1509 = vadd.f32 %v1501, 1.0
        %v1510 = vrcp.pop %v1502
        %v1511 = vmul.f32 %v1502, %v1510
        %v1512 = vsub.f32 1.0, %v1511
        %v1513 = vmul.f32 %v1510, %v1512
        %v1514 = vadd.f32 %v1510, %v1513
        %vm1515 = vweird.f32 %v1502
        %vm1516 = vweird.f32 %v1510
        %vm1517 = vmor %vm1515, %vm1516
        %v1518 = vsel %vm1517, %v1510, %v1514
        %v1519 = vand.u32 2147483647, %v1502
        %vm1520 = vcmp.eq.f32.partialorder %v1519, 8.507059e+37
        %v1521 = vand.u32 %v1502, 2147483648
        %v1522 = vor.u32 1.1754944e-38, %v1521
        %v1523 = vsel %vm1520, %v1522, %v1518
        %v1524 = vmul.f32 1.0, %v1523
        %v1525 = vrcp.pop %v1503
        %v1526 = vmul.f32 %v1503, %v1525
        %v1527 = vsub.f32 1.0, %v1526
        %v1528 = vmul.f32 %v1525, %v1527
        %v1529 = vadd.f32 %v1525, %v1528
        %vm1530 = vweird.f32 %v1503
        %vm1531 = vweird.f32 %v1525
        %vm1532 = vmor %vm1530, %vm1531
        %v1533 = vsel %vm1532, %v1525, %v1529
        %v1534 = vand.u32 2147483647, %v1503
        %vm1535 = vcmp.eq.f32.partialorder %v1534, 8.507059e+37
        %v1536 = vand.u32 %v1503, 2147483648
        %v1537 = vor.u32 1.1754944e-38, %v1536
        %v1538 = vsel %vm1535, %v1537, %v1533
        %v1539 = vmul.f32 1.0, %v1538
        %v1540 = vrcp.pop %v1504
        %v1541 = vmul.f32 %v1504, %v1540
        %v1542 = vsub.f32 1.0, %v1541
        %v1543 = vmul.f32 %v1540, %v1542
        %v1544 = vadd.f32 %v1540, %v1543
        %vm1545 = vweird.f32 %v1504
        %vm1546 = vweird.f32 %v1540
        %vm1547 = vmor %vm1545, %vm1546
        %v1548 = vsel %vm1547, %v1540, %v1544
        %v1549 = vand.u32 2147483647, %v1504
        %vm1550 = vcmp.eq.f32.partialorder %v1549, 8.507059e+37
        %v1551 = vand.u32 %v1504, 2147483648
        %v1552 = vor.u32 1.1754944e-38, %v1551
        %v1553 = vsel %vm1550, %v1552, %v1548
        %v1554 = vmul.f32 1.0, %v1553
        %v1555 = vrcp.pop %v1505
        %v1556 = vmul.f32 %v1505, %v1555
        %v1557 = vsub.f32 1.0, %v1556
        %v1558 = vmul.f32 %v1555, %v1557
        %v1559 = vadd.f32 %v1555, %v1558
        %vm1560 = vweird.f32 %v1505
        %vm1561 = vweird.f32 %v1555
        %vm1562 = vmor %vm1560, %vm1561
        %v1563 = vsel %vm1562, %v1555, %v1559
        %v1564 = vand.u32 2147483647, %v1505
        %vm1565 = vcmp.eq.f32.partialorder %v1564, 8.507059e+37
        %v1566 = vand.u32 %v1505, 2147483648
        %v1567 = vor.u32 1.1754944e-38, %v1566
        %v1568 = vsel %vm1565, %v1567, %v1563
        %v1569 = vmul.f32 1.0, %v1568
        %v1570 = vrcp.pop %v1506
        %v1571 = vmul.f32 %v1506, %v1570
        %v1572 = vsub.f32 1.0, %v1571
        %v1573 = vmul.f32 %v1570, %v1572
        %v1574 = vadd.f32 %v1570, %v1573
        %vm1575 = vweird.f32 %v1506
        %vm1576 = vweird.f32 %v1570
        %vm1577 = vmor %vm1575, %vm1576
        %v1578 = vsel %vm1577, %v1570, %v1574
        %v1579 = vand.u32 2147483647, %v1506
        %vm1580 = vcmp.eq.f32.partialorder %v1579, 8.507059e+37
        %v1581 = vand.u32 %v1506, 2147483648
        %v1582 = vor.u32 1.1754944e-38, %v1581
        %v1583 = vsel %vm1580, %v1582, %v1578
        %v1584 = vmul.f32 1.0, %v1583
        %v1585 = vrcp.pop %v1507
        %v1586 = vmul.f32 %v1507, %v1585
        %v1587 = vsub.f32 1.0, %v1586
        %v1588 = vmul.f32 %v1585, %v1587
        %v1589 = vadd.f32 %v1585, %v1588
        %vm1590 = vweird.f32 %v1507
        %vm1591 = vweird.f32 %v1585
        %vm1592 = vmor %vm1590, %vm1591
        %v1593 = vsel %vm1592, %v1585, %v1589
        %v1594 = vand.u32 2147483647, %v1507
        %vm1595 = vcmp.eq.f32.partialorder %v1594, 8.507059e+37
        %v1596 = vand.u32 %v1507, 2147483648
        %v1597 = vor.u32 1.1754944e-38, %v1596
        %v1598 = vsel %vm1595, %v1597, %v1593
        %v1599 = vmul.f32 1.0, %v1598
        %v1600 = vrcp.pop %v1508
        %v1601 = vmul.f32 %v1508, %v1600
        %v1602 = vsub.f32 1.0, %v1601
        %v1603 = vmul.f32 %v1600, %v1602
        %v1604 = vadd.f32 %v1600, %v1603
        %vm1605 = vweird.f32 %v1508
        %vm1606 = vweird.f32 %v1600
        %vm1607 = vmor %vm1605, %vm1606
        %v1608 = vsel %vm1607, %v1600, %v1604
        %v1609 = vand.u32 2147483647, %v1508
        %vm1610 = vcmp.eq.f32.partialorder %v1609, 8.507059e+37
        %v1611 = vand.u32 %v1508, 2147483648
        %v1612 = vor.u32 1.1754944e-38, %v1611
        %v1613 = vsel %vm1610, %v1612, %v1608
        %v1614 = vmul.f32 1.0, %v1613
        %v1615 = vrcp.pop %v1509
        %v1616 = vmul.f32 %v1509, %v1615
        %v1617 = vsub.f32 1.0, %v1616
        %v1618 = vmul.f32 %v1615, %v1617
        %v1619 = vadd.f32 %v1615, %v1618
        %vm1620 = vweird.f32 %v1509
        %vm1621 = vweird.f32 %v1615
        %vm1622 = vmor %vm1620, %vm1621
        %v1623 = vsel %vm1622, %v1615, %v1619
        %v1624 = vand.u32 2147483647, %v1509
        %vm1625 = vcmp.eq.f32.partialorder %v1624, 8.507059e+37
        %v1626 = vand.u32 %v1509, 2147483648
        %v1627 = vor.u32 1.1754944e-38, %v1626
        %v1628 = vsel %vm1625, %v1627, %v1623
        %v1629 = vmul.f32 1.0, %v1628
        %v1630 = vmul.f32 %v1470, %v1524
        %v1631 = vmul.f32 %v1471, %v1539
        %v1632 = vmul.f32 %v1472, %v1554
        %v1633 = vmul.f32 %v1473, %v1569
        %v1634 = vmul.f32 %v1474, %v1584
        %v1635 = vmul.f32 %v1475, %v1599
        %v1636 = vmul.f32 %v1476, %v1614
        %v1637 = vmul.f32 %v1477, %v1629
        %v1638 = vpack.c.bf16 %v1631, %v1630
        %v1639 = vpack.c.bf16 %v1633, %v1632
        %v1640 = vpack.c.bf16 %v1635, %v1634
        %v1641 = vpack.c.bf16 %v1637, %v1636
        %v1642 = vld [vmem:[#allocation11] sm:$0xf]
        %v1643 = vld [vmem:[#allocation11 + $0x4] sm:$0xf]
        %v1644 = vld [vmem:[#allocation11 + $0x8] sm:$0xf]
        %v1645 = vld [vmem:[#allocation11 + $0xc] sm:$0xf]
        %v1646 = vld [vmem:[#allocation11 + $0x10] sm:$0xf]
        %v1647 = vld [vmem:[#allocation11 + $0x14] sm:$0xf]
        %v1648 = vld [vmem:[#allocation11 + $0x18] sm:$0xf]
        %v1649 = vld [vmem:[#allocation11 + $0x1c] sm:$0xf]
        %v1650 = vld [vmem:[#allocation11 + $0x20] sm:$0xf]
        %v1651 = vld [vmem:[#allocation11 + $0x24] sm:$0xf]
        %v1652 = vld [vmem:[#allocation11 + $0x28] sm:$0xf]
        %v1653 = vld [vmem:[#allocation11 + $0x2c] sm:$0xf]
        %v1654 = vld [vmem:[#allocation11 + $0x30] sm:$0xf]
        %v1655 = vld [vmem:[#allocation11 + $0x34] sm:$0xf]
        %v1656 = vld [vmem:[#allocation11 + $0x38] sm:$0xf]
        %v1657 = vld [vmem:[#allocation11 + $0x3c] sm:$0xf]
        %v1658 = vld [vmem:[%s10] sm:$0x1]
        %v1660 = vperm.slane %v1658, 0
        %v1678 = vunpack.c.l.b16 %v1642
        %v1679 = vunpack.c.l.b16 %v1643
        %v1680 = vunpack.c.l.b16 %v1644
        %v1681 = vunpack.c.l.b16 %v1645
        %v1682 = vunpack.c.l.b16 %v1646
        %v1683 = vunpack.c.l.b16 %v1647
        %v1684 = vunpack.c.l.b16 %v1648
        %v1685 = vunpack.c.l.b16 %v1649
        %v1686 = vunpack.c.l.b16 %v1650
        %v1687 = vunpack.c.l.b16 %v1651
        %v1688 = vunpack.c.l.b16 %v1652
        %v1689 = vunpack.c.l.b16 %v1653
        %v1690 = vunpack.c.l.b16 %v1654
        %v1691 = vunpack.c.l.b16 %v1655
        %v1692 = vunpack.c.l.b16 %v1656
        %v1693 = vunpack.c.l.b16 %v1657
        %v1694 = vpack.c.b16 %v1679, %v1678
        %v1695 = vpack.c.b16 %v1681, %v1680
        %v1696 = vpack.c.b16 %v1683, %v1682
        %v1697 = vpack.c.b16 %v1685, %v1684
        %v1698 = vpack.c.b16 %v1687, %v1686
        %v1699 = vpack.c.b16 %v1689, %v1688
        %v1700 = vpack.c.b16 %v1691, %v1690
        %v1701 = vpack.c.b16 %v1693, %v1692
        %1710 = vmatpush.bf16.msra.mxu0 %v1701
        %1711 = vmatpush.bf16.msra.mxu0 %v1700
        %1712 = vmatpush.bf16.msra.mxu0 %v1699
        %1713 = vmatpush.bf16.msra.mxu0 %v1698
        %1714 = vmatpush.bf16.msra.mxu0 %v1697
        %1715 = vmatpush.bf16.msra.mxu0 %v1696
        %1716 = vmatpush.bf16.msra.mxu0 %v1695
        %1717 = vmatpush.bf16.msra.mxu0 %v1694
        %1718 = vmatmul.bf16.gmra.mxu0 %v1638
        %v1719 = vpop.f32.mrf.mxu0
        %v1720 = vadd.f32 %v1660, %v1719
        %v1721 = vpop.f32.mrf.mxu0
        %v1722 = vadd.f32 %v1660, %v1721
        %1723 = vmatmul.bf16.gmra.mxu0 %v1639
        %v1724 = vpop.f32.mrf.mxu0
        %v1725 = vadd.f32 %v1660, %v1724
        %v1726 = vpop.f32.mrf.mxu0
        %v1727 = vadd.f32 %v1660, %v1726
        %1728 = vmatmul.bf16.gmra.mxu0 %v1640
        %v1729 = vpop.f32.mrf.mxu0
        %v1730 = vadd.f32 %v1660, %v1729
        %v1731 = vpop.f32.mrf.mxu0
        %v1732 = vadd.f32 %v1660, %v1731
        %1733 = vmatmul.bf16.gmra.mxu0 %v1641
        %v1734 = vpop.f32.mrf.mxu0
        %v1735 = vadd.f32 %v1660, %v1734
        %v1736 = vpop.f32.mrf.mxu0
        %v1737 = vadd.f32 %v1660, %v1736
        %1738 = vdwg.mxu0
        %1739 = vst [vmem:[%s485] sm:$0xff] %v1720
        %1740 = vst [vmem:[%s485 + $0x8] sm:$0xff] %v1722
        %1741 = vst [vmem:[%s485 + $0x10] sm:$0xff] %v1725
        %1742 = vst [vmem:[%s485 + $0x18] sm:$0xff] %v1727
        %1743 = vst [vmem:[%s485 + $0x20] sm:$0xff] %v1730
        %1744 = vst [vmem:[%s485 + $0x28] sm:$0xff] %v1732
        %1745 = vst [vmem:[%s485 + $0x30] sm:$0xff] %v1735
        %1746 = vst [vmem:[%s485 + $0x38] sm:$0xff] %v1737
        %s1747 = sand.u32 %s275, 1
        %s1748 = scalar_lea.sflag [#allocation4], %s1747
        %s1749 = sand.u32 %s275, 1
        %s1750 = smul.addr %s1749, 64
        %s1751 = scalar_lea.vmem [#allocation13], %s1750
        // Predicated region
        $region89: #{tpu_custom_call.1} parent=63 // pred_check
          %p1752 = pneg %p285
        $region90: #{tpu_custom_call.1} parent=63 // pred_check_branch
          %1754 = sbr.rel (%p1752) target = $region92
        $region91: #{tpu_custom_call.1} parent=63 // pred_region
          %1756 = vsyncadd %s1748, 0
          %s1757 = smul.addr %s31, 8
          %s1758 = smul.addr %s1757, 8
          %s1759 = scalar_lea.hbm %s11, %s1758
          %s1760 = sshll.u32 %s1751, 4
          %s1761 = int_to_ptr.vmem [resolvable:$true] %s1760
          %s1762 = sshll.u32 %s1759, 4
          %s1763 = int_to_ptr.hbm [resolvable:$true] %s1762
          %1768 = dma.vmem_to_hbm [thread:$0]  %s1761, 1024, %s1763, %s1748, 128, 128, 8
        $region92: #{tpu_custom_call.1} parent=63 // pred_fallthru
          _
      $region64: #{tpu_custom_call.1} parent=5 // pred_fallthru
        _
      %p1769 = scmp.le.s32.totalorder 2, %s26
      // Predicated region
      $region93: #{tpu_custom_call.1} parent=5 // pred_check
        %p1770 = pneg %p1769
      $region94: #{tpu_custom_call.1} parent=5 // pred_check_branch
        %1772 = sbr.rel (%p1770) target = $region96
      $region95: #{tpu_custom_call.1} parent=5 // pred_region
        %s1773 = ssub.s32 %s26, 2
        // Predicated region
        $region97: #{tpu_custom_call.1} parent=95 // pred_check
          %p1774 = pneg %p291
        $region98: #{tpu_custom_call.1} parent=95 // pred_check_branch
          %1776 = sbr.rel (%p1774) target = $region100
        $region99: #{tpu_custom_call.1} parent=95 // pred_region
          %s1777 = sand.u32 %s276, 1
          %s1778 = scalar_lea.sflag [#allocation4], %s1777
          %s1779 = sand.u32 %s276, 1
          %s1780 = smul.addr %s1779, 64
          %s1781 = scalar_lea.vmem [#allocation13], %s1780
          %1783 = dma.done %s1778, 1024
        $region100: #{tpu_custom_call.1} parent=95 // pred_fallthru
          _
      $region96: #{tpu_custom_call.1} parent=5 // pred_fallthru
        _
    $region6: #{tpu_custom_call.1} parent=1 // loop_footer
      %s30 = sadd.s32 1, %s26
    $region7: #{tpu_custom_call.1} parent=1 // loop_footer_branch
      %25 = sbr.rel target = $region3
    $region8: #{tpu_custom_call.1} parent=1 // loop_exit
      _
    %1784 = vsyncpa [#allocation3], 1
    %s1785 = scalar_lea.sflag [#allocation3], 1
    %1786 = vsyncpa %s1785, 1
    %1787 = vsyncpa [#allocation6], 1
    %1788 = vsyncpa [#allocation9], 1
    %1789 = vsyncpa [#allocation12], 1
    %1790 = vsyncpa [#allocation4], 1
    %s1791 = scalar_lea.sflag [#allocation4], 1
    %1792 = vsyncpa %s1791, 1

</llo_original>
